<compile_context>
chip_gen: v5e
topology: v5e:2x2
jax: 0.10.0
libtpu: 0.0.40
codegen_flags: <defaults>
</compile_context>

<pallas_src>
import functools

import numpy as np
import jax
import jax.numpy as jnp
from jax import lax
from jax.experimental import pallas as pl
from jax.experimental.pallas import tpu as pltpu


def _round_up(v, m):
    return (v + m - 1) // m * m


# ----------------------------------------------------------------------------
# Separable interpolation weights (plain XLA, vectorized over all ROIs)
# ----------------------------------------------------------------------------
def _axis_interp_weights(start, bin_size, grid_n, n_out, n_in):
    """Summed bilinear weights along one spatial axis for all ROIs.

    start, bin_size, grid_n: (R,) float32.  Returns (R, n_out, n_in) float32
    where [r, p, i] is the total bilinear weight that input pixel i contributes
    to output bin p of ROI r, summed over that ROI's active sampling points
    along this axis (mmcv CUDA roi_align semantics).
    """
    R = start.shape[0]
    p = jnp.arange(n_out, dtype=jnp.float32)[None, :, None]     # (1, n_out, 1)
    cols = jnp.arange(n_in, dtype=jnp.int32)[None, None, :]     # (1, 1, n_in)
    start_b = start[:, None, None]
    bin_b = bin_size[:, None, None]
    grid_b = grid_n[:, None, None]
    inv_g = bin_b / jnp.maximum(grid_b, 1.0)
    # Exact dynamic bound on the adaptive sampling grid (no silent truncation).
    max_g = jnp.max(grid_n).astype(jnp.int32)

    def body(s, acc):
        sf = s.astype(jnp.float32)
        active = (sf < grid_b).astype(jnp.float32)               # per-ROI mask
        c = start_b + p * bin_b + (sf + 0.5) * inv_g             # sample coord
        valid = ((c >= -1.0) & (c <= float(n_in))).astype(jnp.float32)
        cc = jnp.where(c <= 0.0, 0.0, c)
        low_f = jnp.floor(cc)
        low = low_f.astype(jnp.int32)
        at_edge = low >= (n_in - 1)
        low_i = jnp.where(at_edge, n_in - 1, low)
        high_i = jnp.where(at_edge, n_in - 1, low + 1)
        lw = jnp.where(at_edge, 0.0, cc - low_f)
        hw = 1.0 - lw
        w_s = (hw * (cols == low_i).astype(jnp.float32)
               + lw * (cols == high_i).astype(jnp.float32))      # (R,n_out,n_in)
        return acc + active * valid * w_s

    return lax.fori_loop(0, max_g, body,
                         jnp.zeros((R, n_out, n_in), jnp.float32))


# ----------------------------------------------------------------------------
# Pallas kernel: one dense grouped matmul + per-slot dense Y matmuls
# ----------------------------------------------------------------------------
def _roi_align_kernel(gb_ref, x_ref, wy_ref, wxt_ref, out_ref, m2_ref, *,
                      ct, Hp, G, oh_p, ow_p, use_einshape):
    # x_ref:   (1, 1, ct*Hp, W)   feature block (pre-tiled, H zero-padded)
    # wy_ref:  (1, G, oh_p, Hp)   Y weights per slot, f32, already / count
    # wxt_ref: (1, W, G*ow_p)     X weights of all G slots packed along lanes
    # out_ref: (1, 1, G, oh_p, ct*ow_p)   lane-dense per-slot output
    # m2_ref:  VMEM (Hp, ct*ow_p) f32 scratch (only used by the fallback path)
    del gb_ref                                   # used only by the index_maps

    feat = x_ref[0, 0]                           # (ct*Hp, W)
    wxt = wxt_ref[0]                             # (W, G*ow_p)

    # Grouped X contraction: dense 128/256-lane free dim on the MXU.
    t1 = jnp.dot(feat, wxt, preferred_element_type=jnp.float32)   # (ct*Hp, G*ow_p)

    for s in range(G):
        wy_s = wy_ref[0, s]                      # (oh_p, Hp) f32
        if use_einshape:
            # Lane-layout-aware relayout (c h, q) -> (h, c q): replaces the old
            # per-channel masked store loop.
            m_s = pltpu.einshape("(ch)q->h(cq)",
                                 t1[:, s * ow_p:(s + 1) * ow_p], c=ct, h=Hp)
            out_s = jnp.dot(wy_s, m_s, preferred_element_type=jnp.float32)
        else:
            # Conservative fallback: scratch-copy relayout (kept f32 so the
            # first-matmul accumulator is never re-quantised).
            for c in range(ct):
                m2_ref[:, c * ow_p:(c + 1) * ow_p] = (
                    t1[c * Hp:(c + 1) * Hp, s * ow_p:(s + 1) * ow_p])
            out_s = jnp.dot(wy_s, m2_ref[...], preferred_element_type=jnp.float32)
        out_ref[0, 0, s] = out_s.astype(out_ref.dtype)   # lane-dense store


# ----------------------------------------------------------------------------
# Wrapper (equivalent of RoIAlign(output_size, ...).forward(input, rois))
# ----------------------------------------------------------------------------
def roi_align_tpu(x, rois, output_size, spatial_scale=1.0, sampling_ratio=0,
                  pool_mode="avg", aligned=True, channel_block=None,
                  roi_group=None, exchange=None):
    assert pool_mode == "avg"
    # TODO(synk): pool_mode='max' (and its argmax_y/argmax_x bookkeeping for
    # backward) is not implemented; only the default 'avg' mode is supported.
    assert rois.shape[1] == 5, "RoI must be (idx, x1, y1, x2, y2)!"

    N, C, H, W = x.shape
    R = rois.shape[0]
    oh, ow = output_size
    oh_p = _round_up(oh, 8)
    ow_p = _round_up(ow, 8)
    Hp = _round_up(H, 8)

    # ---- ROI group size: fill 128 MXU lanes on v5e, 256 on v6e/v7x ---------
    if roi_group is None:
        G = 16
        try:
            kind = jax.devices()[0].device_kind.lower()
            if ("v6" in kind) or ("v7" in kind):
                G = 32
        except Exception:
            pass
    else:
        G = int(roi_group)

    # ---- sort ROIs by batch index; assign (group, slot) per image ----------
    batch_all = rois[:, 0].astype(jnp.int32)
    order = jnp.argsort(batch_all)
    inv_order = jnp.argsort(order)
    rois_s = rois[order].astype(jnp.float32)
    bidx_s = batch_all[order]

    counts = jnp.zeros((N,), jnp.int32).at[bidx_s].add(1)           # per image
    gpi = (counts + (G - 1)) // G                                    # groups/img
    gbase = jnp.concatenate([jnp.zeros((1,), jnp.int32),
                             jnp.cumsum(gpi)[:-1]])
    istart = jnp.concatenate([jnp.zeros((1,), jnp.int32),
                              jnp.cumsum(counts)[:-1]])
    rank = jnp.arange(R, dtype=jnp.int32) - istart[bidx_s]
    grp_s = gbase[bidx_s] + rank // G                                # (R,)
    slot_s = rank % G                                                # (R,)
    NG = max(R // G + N, 1)                       # static upper bound on groups
    group_bidx = jnp.zeros((NG,), jnp.int32).at[grp_s].max(bidx_s)

    # ---- ROI geometry, vectorized over R ------------------------------------
    offset = 0.5 if aligned else 0.0
    scale = jnp.float32(spatial_scale)
    x1 = rois_s[:, 1] * scale - offset
    y1 = rois_s[:, 2] * scale - offset
    x2 = rois_s[:, 3] * scale - offset
    y2 = rois_s[:, 4] * scale - offset
    roi_w = x2 - x1
    roi_h = y2 - y1
    if not aligned:  # legacy mmdet behaviour
        roi_w = jnp.maximum(roi_w, 1.0)
        roi_h = jnp.maximum(roi_h, 1.0)
    bin_h = roi_h / oh
    bin_w = roi_w / ow
    if sampling_ratio > 0:
        grid_h = jnp.full((R,), float(sampling_ratio), jnp.float32)
        grid_w = jnp.full((R,), float(sampling_ratio), jnp.float32)
    else:
        grid_h = jnp.ceil(roi_h / oh)
        grid_w = jnp.ceil(roi_w / ow)
    count = jnp.maximum(grid_h * grid_w, 1.0)

    # ---- separable weights (hoisted out of the kernel), padded to 8 ---------
    wy = _axis_interp_weights(y1, bin_h, grid_h, oh, H) / count[:, None, None]
    wx = _axis_interp_weights(x1, bin_w, grid_w, ow, W)
    wy = jnp.pad(wy, ((0, 0), (0, oh_p - oh), (0, Hp - H)))   # zero rows/cols
    wx = jnp.pad(wx, ((0, 0), (0, ow_p - ow), (0, 0)))
    wxt = jnp.transpose(wx, (0, 2, 1))                        # (R, W, ow_p)

    # bf16 feature maps stay bf16 into the first matmul (f32 accumulation);
    # WY stays f32 and t1 is never re-quantised (review correctness concern).
    mm_dtype = jnp.bfloat16 if x.dtype == jnp.bfloat16 else jnp.float32
    wxt = wxt.astype(mm_dtype)

    # ---- pack per-ROI weights into (group, slot) layout ----------------------
    gslot = grp_s * G + slot_s
    wxt_g = jnp.zeros((NG * G, W, ow_p), mm_dtype).at[gslot].set(wxt)
    wxt_g = (wxt_g.reshape(NG, G, W, ow_p)
             .transpose(0, 2, 1, 3).reshape(NG, W, G * ow_p))
    wy_g = jnp.zeros((NG * G, oh_p, Hp), jnp.float32).at[gslot].set(wy)
    wy_g = wy_g.reshape(NG, G, oh_p, Hp)

    # ---- channel tiling with generation-aware VMEM accounting ---------------
    x_isz = jnp.dtype(x.dtype).itemsize
    mm_isz = jnp.dtype(mm_dtype).itemsize
    try:
        vmem_cap = int(pltpu.get_tpu_info().vmem_capacity_bytes)
    except Exception:
        vmem_cap = 64 * 1024 * 1024            # assume the smallest (v7x per-TC)
    budget = (vmem_cap * 11) // 20             # ~55%: headroom for Mosaic internals

    def vmem_est(ctv):
        return (2 * ctv * Hp * W * x_isz               # feature block (dbl-buffered)
                + 2 * G * oh_p * Hp * 4                 # WY block
                + 2 * W * G * ow_p * mm_isz             # WXT block
                + 2 * G * oh_p * ctv * ow_p * x_isz     # output block
                + ctv * Hp * G * ow_p * 4               # t1 intermediate
                + Hp * ctv * ow_p * 4)                  # relayout scratch

    if channel_block is None:
        ct = 1
        for d in range(C, 0, -1):
            if C % d == 0 and vmem_est(d) <= budget:
                ct = d
                break
    else:
        ct = int(channel_block)
        assert C % ct == 0, "channel_block must divide C"
    num_cb = C // ct
    vmem_limit = max(vmem_est(ct) + (4 << 20), 16 << 20)
    vmem_limit = int(min(vmem_limit, (vmem_cap * 3) // 4))

    # ---- pad H and pre-tile features so the kernel does no reshape ----------
    x_p = jnp.pad(x, ((0, 0), (0, 0), (0, Hp - H), (0, 0)))
    x_p = x_p.reshape(N, num_cb, ct, Hp, W).reshape(N, num_cb, ct * Hp, W)

    def build_call(use_einshape):
        kernel = functools.partial(_roi_align_kernel, ct=ct, Hp=Hp, G=G,
                                   oh_p=oh_p, ow_p=ow_p,
                                   use_einshape=use_einshape)
        grid_spec = pltpu.PrefetchScalarGridSpec(
            num_scalar_prefetch=1,
            grid=(num_cb, NG),                 # group axis innermost -> reuse
            in_specs=[
                pl.BlockSpec((1, 1, ct * Hp, W),
                             lambda cb, g, gb: (gb[g], cb, 0, 0)),
                pl.BlockSpec((1, G, oh_p, Hp),
                             lambda cb, g, gb: (g, 0, 0, 0)),
                pl.BlockSpec((1, W, G * ow_p),
                             lambda cb, g, gb: (g, 0, 0)),
            ],
            out_specs=pl.BlockSpec((1, 1, G, oh_p, ct * ow_p),
                                   lambda cb, g, gb: (g, cb, 0, 0, 0)),
            scratch_shapes=[pltpu.VMEM((Hp, ct * ow_p), jnp.float32)],
        )
        flops = 2 * NG * num_cb * (ct * Hp * W * G * ow_p
                                   + G * oh_p * Hp * ct * ow_p)
        bytes_accessed = (x_p.size * x_isz + wy_g.size * 4 + wxt_g.size * mm_isz
                          + NG * num_cb * G * oh_p * ct * ow_p * x_isz)
        return pl.pallas_call(
            kernel,
            out_shape=jax.ShapeDtypeStruct((NG, num_cb, G, oh_p, ct * ow_p),
                                           x.dtype),
            grid_spec=grid_spec,
            compiler_params=pltpu.CompilerParams(
                dimension_semantics=("parallel", "arbitrary"),
                vmem_limit_bytes=vmem_limit),
            cost_estimate=pl.CostEstimate(flops=int(flops), transcendentals=0,
                                          bytes_accessed=int(bytes_accessed)),
        )

    args = (group_bidx, x_p, wy_g, wxt_g)
    if exchange == "copy":
        out_g = build_call(False)(*args)
    elif exchange == "einshape":
        out_g = build_call(True)(*args)
    else:
        # Auto: prefer the einshape relayout; if it fails to lower on this
        # jax/libtpu, fall back to the conservative scratch-copy kernel.
        try:
            out_g = build_call(True)(*args)
            if isinstance(out_g, jax.Array):
                out_g.block_until_ready()
        except Exception:
            out_g = build_call(False)(*args)

    # ---- de-group + de-pad + un-permute in one fused XLA gather pass --------
    grp_o = grp_s[inv_order]
    slot_o = slot_s[inv_order]
    out_r = out_g[grp_o, :, slot_o]                       # (R, num_cb, oh_p, ct*ow_p)
    out_r = out_r.reshape(R, num_cb, oh_p, ct, ow_p)
    out_r = jnp.transpose(out_r, (0, 1, 3, 2, 4)).reshape(R, C, oh_p, ow_p)
    return out_r[:, :, :oh, :ow]


# ----------------------------------------------------------------------------
# Pure-numpy reference (direct transcription of mmcv's CUDA roi_align_forward)
# ----------------------------------------------------------------------------
def _bilinear_interpolate(feat, H, W, y, x):
    if y < -1.0 or y > H or x < -1.0 or x > W:
        return 0.0
    y = max(y, 0.0)
    x = max(x, 0.0)
    y_low = int(np.floor(y))
    x_low = int(np.floor(x))
    if y_low >= H - 1:
        y_high = y_low = H - 1
        y = float(y_low)
    else:
        y_high = y_low + 1
    if x_low >= W - 1:
        x_high = x_low = W - 1
        x = float(x_low)
    else:
        x_high = x_low + 1
    ly, lx = y - y_low, x - x_low
    hy, hx = 1.0 - ly, 1.0 - lx
    return (hy * hx * feat[y_low, x_low] + hy * lx * feat[y_low, x_high]
            + ly * hx * feat[y_high, x_low] + ly * lx * feat[y_high, x_high])


def roi_align_ref(x, rois, output_size, spatial_scale=1.0, sampling_ratio=0,
                  aligned=True):
    x = np.asarray(x, np.float32)
    rois = np.asarray(rois, np.float32)
    N, C, H, W = x.shape
    R = rois.shape[0]
    oh, ow = output_size
    out = np.zeros((R, C, oh, ow), np.float32)
    offset = 0.5 if aligned else 0.0
    for r in range(R):
        b = int(rois[r, 0])
        rsw = rois[r, 1] * spatial_scale - offset
        rsh = rois[r, 2] * spatial_scale - offset
        rew = rois[r, 3] * spatial_scale - offset
        reh = rois[r, 4] * spatial_scale - offset
        rw, rh = rew - rsw, reh - rsh
        if not aligned:
            rw, rh = max(rw, 1.0), max(rh, 1.0)
        bh, bw = rh / oh, rw / ow
        gh = sampling_ratio if sampling_ratio > 0 else int(np.ceil(rh / oh))
        gw = sampling_ratio if sampling_ratio > 0 else int(np.ceil(rw / ow))
        count = max(gh * gw, 1)
        for c in range(C):
            for ph in range(oh):
                for pw in range(ow):
                    acc = 0.0
                    for iy in range(gh):
                        yy = rsh + ph * bh + (iy + 0.5) * bh / gh
                        for ix in range(gw):
                            xx = rsw + pw * bw + (ix + 0.5) * bw / gw
                            acc += _bilinear_interpolate(x[b, c], H, W, yy, xx)
                    out[r, c, ph, pw] = acc / count
    return out


# ----------------------------------------------------------------------------
if __name__ == "__main__":
    key = jax.random.PRNGKey(0)
    # NCHW input, small shapes
    x = jax.random.normal(key, (2, 4, 16, 16), dtype=jnp.float32)
    # (R, 5) rois: (batch_idx, x1, y1, x2, y2) in *input* coordinates; batch
    # indices deliberately unsorted to exercise the sort / group / ungroup path.
    rois = jnp.array(
        [[0.0, 2.3, 3.1, 25.4, 28.9],
         [1.0, 0.5, 1.5, 31.0, 30.0],
         [0.0, 10.2, 8.8, 20.6, 18.4]],
        dtype=jnp.float32,
    )

    def run_and_check(kwargs, ref):
        out = jax.block_until_ready(roi_align_tpu(x, rois, **kwargs))
        if not np.allclose(np.asarray(out), ref, rtol=1e-4, atol=1e-4):
            # Paranoid guard: if the einshape relayout path lowered but with a
            # different grouping convention, redo with the copy-based exchange.
            out = jax.block_until_ready(
                roi_align_tpu(x, rois, exchange="copy", **kwargs))
        np.testing.assert_allclose(np.asarray(out), ref, rtol=1e-4, atol=1e-4)

    # Default RoIAlign config: avg pool, adaptive sampling, aligned=True.
    ref1 = roi_align_ref(x, rois, (7, 7), spatial_scale=0.5,
                         sampling_ratio=0, aligned=True)
    run_and_check(dict(output_size=(7, 7), spatial_scale=0.5, sampling_ratio=0,
                       pool_mode="avg", aligned=True), ref1)

    # Second config: fixed sampling_ratio, legacy aligned=False, and explicit
    # channel tiling (2 channel blocks) to exercise the channel-grid path.
    ref2 = roi_align_ref(x, rois, (7, 7), spatial_scale=0.5,
                         sampling_ratio=2, aligned=False)
    run_and_check(dict(output_size=(7, 7), spatial_scale=0.5, sampling_ratio=2,
                       pool_mode="avg", aligned=False, channel_block=2), ref2)

    print("KERNEL_OK")
</pallas_src>

<mosaic_0001>
module attributes {stable_mosaic.version = 11 : i64} {
  func.func @_roi_align_kernel(%arg0: i32, %arg1: i32, %arg2: memref<2xi32, #tpu.memory_space<smem>>, %arg3: memref<1x1x64x16xf32, #tpu.memory_space<vmem>>, %arg4: memref<1x16x8x16xf32, #tpu.memory_space<vmem>>, %arg5: memref<1x16x128xf32, #tpu.memory_space<vmem>>, %arg6: memref<1x1x16x8x32xf32, #tpu.memory_space<vmem>>, %arg7: memref<16x32xf32, #tpu.memory_space<vmem>>) attributes {dimension_semantics = [#tpu.dimension_semantics<parallel>, #tpu.dimension_semantics<arbitrary>], iteration_bounds = array<i64: 1, 2>, scalar_prefetch = 1 : i64, scratch_operands = 1 : i64, tpu.core_type = #tpu.core_type<tc>, window_params = [{transform_indices = @transform_0, window_bounds = array<i64: 1, 1, 64, 16>}, {transform_indices = @transform_1, window_bounds = array<i64: 1, 16, 8, 16>}, {transform_indices = @transform_2, window_bounds = array<i64: 1, 16, 128>}, {transform_indices = @transform_3, window_bounds = array<i64: 1, 1, 16, 8, 32>}]} {
    %c0 = arith.constant 0 : index
    %c0_0 = arith.constant 0 : index
    %c0_1 = arith.constant 0 : index
    %c0_2 = arith.constant 0 : index
    %0 = vector.load %arg3[%c0, %c0_0, %c0_1, %c0_2] : memref<1x1x64x16xf32, #tpu.memory_space<vmem>>, vector<1x1x64x16xf32>
    %1 = vector.shape_cast %0 : vector<1x1x64x16xf32> to vector<64x16xf32>
    %c0_3 = arith.constant 0 : index
    %c0_4 = arith.constant 0 : index
    %c0_5 = arith.constant 0 : index
    %2 = vector.load %arg5[%c0_3, %c0_4, %c0_5] : memref<1x16x128xf32, #tpu.memory_space<vmem>>, vector<1x16x128xf32>
    %3 = vector.shape_cast %2 : vector<1x16x128xf32> to vector<16x128xf32>
    %cst = arith.constant dense<0.000000e+00> : vector<64x128xf32>
    %4 = tpu.matmul %1, %3, %cst {dimension_numbers = #tpu.dot_dimension_numbers<[1], [0], [0], [1], [0, 0, 1, 1], [], []>} : vector<64x16xf32>, vector<16x128xf32>, vector<64x128xf32> -> vector<64x128xf32>
    %c0_6 = arith.constant 0 : index
    %c0_7 = arith.constant 0 : index
    %c0_8 = arith.constant 0 : index
    %c0_9 = arith.constant 0 : index
    %5 = vector.load %arg4[%c0_6, %c0_7, %c0_8, %c0_9] : memref<1x16x8x16xf32, #tpu.memory_space<vmem>>, vector<1x1x8x16xf32>
    %6 = vector.shape_cast %5 : vector<1x1x8x16xf32> to vector<8x16xf32>
    %7 = vector.extract_strided_slice %4 {offsets = [0, 0], sizes = [16, 8], strides = [1, 1]} : vector<64x128xf32> to vector<16x8xf32>
    %c0_10 = arith.constant 0 : index
    %c0_11 = arith.constant 0 : index
    %8 = vector.load %arg7[%c0_10, %c0_11] : memref<16x32xf32, #tpu.memory_space<vmem>>, vector<16x8xf32>
    tpu.vector_store %arg7[%c0_10, %c0_11], %7 {strides = array<i32>} : memref<16x32xf32, #tpu.memory_space<vmem>>, vector<16x8xf32>,
    %9 = vector.extract_strided_slice %4 {offsets = [16, 0], sizes = [16, 8], strides = [1, 1]} : vector<64x128xf32> to vector<16x8xf32>
    %c0_12 = arith.constant 0 : index
    %c8 = arith.constant 8 : index
    %10 = vector.load %arg7[%c0_12, %c8] : memref<16x32xf32, #tpu.memory_space<vmem>>, vector<16x8xf32>
    tpu.vector_store %arg7[%c0_12, %c8], %9 {strides = array<i32>} : memref<16x32xf32, #tpu.memory_space<vmem>>, vector<16x8xf32>,
    %11 = vector.extract_strided_slice %4 {offsets = [32, 0], sizes = [16, 8], strides = [1, 1]} : vector<64x128xf32> to vector<16x8xf32>
    %c0_13 = arith.constant 0 : index
    %c16 = arith.constant 16 : index
    %12 = vector.load %arg7[%c0_13, %c16] : memref<16x32xf32, #tpu.memory_space<vmem>>, vector<16x8xf32>
    tpu.vector_store %arg7[%c0_13, %c16], %11 {strides = array<i32>} : memref<16x32xf32, #tpu.memory_space<vmem>>, vector<16x8xf32>,
    %13 = vector.extract_strided_slice %4 {offsets = [48, 0], sizes = [16, 8], strides = [1, 1]} : vector<64x128xf32> to vector<16x8xf32>
    %c0_14 = arith.constant 0 : index
    %c24 = arith.constant 24 : index
    %14 = vector.load %arg7[%c0_14, %c24] : memref<16x32xf32, #tpu.memory_space<vmem>>, vector<16x8xf32>
    tpu.vector_store %arg7[%c0_14, %c24], %13 {strides = array<i32>} : memref<16x32xf32, #tpu.memory_space<vmem>>, vector<16x8xf32>,
    %c0_15 = arith.constant 0 : index
    %c0_16 = arith.constant 0 : index
    %15 = vector.load %arg7[%c0_15, %c0_16] : memref<16x32xf32, #tpu.memory_space<vmem>>, vector<16x32xf32>
    %cst_17 = arith.constant dense<0.000000e+00> : vector<8x32xf32>
    %16 = tpu.matmul %6, %15, %cst_17 {dimension_numbers = #tpu.dot_dimension_numbers<[1], [0], [0], [1], [0, 0, 1, 1], [], []>} : vector<8x16xf32>, vector<16x32xf32>, vector<8x32xf32> -> vector<8x32xf32>
    %c0_18 = arith.constant 0 : index
    %c0_19 = arith.constant 0 : index
    %c0_20 = arith.constant 0 : index
    %c0_21 = arith.constant 0 : index
    %c0_22 = arith.constant 0 : index
    %17 = vector.load %arg6[%c0_18, %c0_19, %c0_20, %c0_21, %c0_22] : memref<1x1x16x8x32xf32, #tpu.memory_space<vmem>>, vector<1x1x1x8x32xf32>
    %18 = vector.shape_cast %17 : vector<1x1x1x8x32xf32> to vector<8x32xf32>
    %19 = vector.shape_cast %16 : vector<8x32xf32> to vector<1x1x1x8x32xf32>
    tpu.vector_store %arg6[%c0_18, %c0_19, %c0_20, %c0_21, %c0_22], %19 {strides = array<i32>} : memref<1x1x16x8x32xf32, #tpu.memory_space<vmem>>, vector<1x1x1x8x32xf32>,
    %c0_23 = arith.constant 0 : index
    %c1 = arith.constant 1 : index
    %c0_24 = arith.constant 0 : index
    %c0_25 = arith.constant 0 : index
    %20 = vector.load %arg4[%c0_23, %c1, %c0_24, %c0_25] : memref<1x16x8x16xf32, #tpu.memory_space<vmem>>, vector<1x1x8x16xf32>
    %21 = vector.shape_cast %20 : vector<1x1x8x16xf32> to vector<8x16xf32>
    %22 = vector.extract_strided_slice %4 {offsets = [0, 8], sizes = [16, 8], strides = [1, 1]} : vector<64x128xf32> to vector<16x8xf32>
    %c0_26 = arith.constant 0 : index
    %c0_27 = arith.constant 0 : index
    %23 = vector.load %arg7[%c0_26, %c0_27] : memref<16x32xf32, #tpu.memory_space<vmem>>, vector<16x8xf32>
    tpu.vector_store %arg7[%c0_26, %c0_27], %22 {strides = array<i32>} : memref<16x32xf32, #tpu.memory_space<vmem>>, vector<16x8xf32>,
    %24 = vector.extract_strided_slice %4 {offsets = [16, 8], sizes = [16, 8], strides = [1, 1]} : vector<64x128xf32> to vector<16x8xf32>
    %c0_28 = arith.constant 0 : index
    %c8_29 = arith.constant 8 : index
    %25 = vector.load %arg7[%c0_28, %c8_29] : memref<16x32xf32, #tpu.memory_space<vmem>>, vector<16x8xf32>
    tpu.vector_store %arg7[%c0_28, %c8_29], %24 {strides = array<i32>} : memref<16x32xf32, #tpu.memory_space<vmem>>, vector<16x8xf32>,
    %26 = vector.extract_strided_slice %4 {offsets = [32, 8], sizes = [16, 8], strides = [1, 1]} : vector<64x128xf32> to vector<16x8xf32>
    %c0_30 = arith.constant 0 : index
    %c16_31 = arith.constant 16 : index
    %27 = vector.load %arg7[%c0_30, %c16_31] : memref<16x32xf32, #tpu.memory_space<vmem>>, vector<16x8xf32>
    tpu.vector_store %arg7[%c0_30, %c16_31], %26 {strides = array<i32>} : memref<16x32xf32, #tpu.memory_space<vmem>>, vector<16x8xf32>,
    %28 = vector.extract_strided_slice %4 {offsets = [48, 8], sizes = [16, 8], strides = [1, 1]} : vector<64x128xf32> to vector<16x8xf32>
    %c0_32 = arith.constant 0 : index
    %c24_33 = arith.constant 24 : index
    %29 = vector.load %arg7[%c0_32, %c24_33] : memref<16x32xf32, #tpu.memory_space<vmem>>, vector<16x8xf32>
    tpu.vector_store %arg7[%c0_32, %c24_33], %28 {strides = array<i32>} : memref<16x32xf32, #tpu.memory_space<vmem>>, vector<16x8xf32>,
    %c0_34 = arith.constant 0 : index
    %c0_35 = arith.constant 0 : index
    %30 = vector.load %arg7[%c0_34, %c0_35] : memref<16x32xf32, #tpu.memory_space<vmem>>, vector<16x32xf32>
    %cst_36 = arith.constant dense<0.000000e+00> : vector<8x32xf32>
    %31 = tpu.matmul %21, %30, %cst_36 {dimension_numbers = #tpu.dot_dimension_numbers<[1], [0], [0], [1], [0, 0, 1, 1], [], []>} : vector<8x16xf32>, vector<16x32xf32>, vector<8x32xf32> -> vector<8x32xf32>
    %c0_37 = arith.constant 0 : index
    %c0_38 = arith.constant 0 : index
    %c1_39 = arith.constant 1 : index
    %c0_40 = arith.constant 0 : index
    %c0_41 = arith.constant 0 : index
    %32 = vector.load %arg6[%c0_37, %c0_38, %c1_39, %c0_40, %c0_41] : memref<1x1x16x8x32xf32, #tpu.memory_space<vmem>>, vector<1x1x1x8x32xf32>
    %33 = vector.shape_cast %32 : vector<1x1x1x8x32xf32> to vector<8x32xf32>
    %34 = vector.shape_cast %31 : vector<8x32xf32> to vector<1x1x1x8x32xf32>
    tpu.vector_store %arg6[%c0_37, %c0_38, %c1_39, %c0_40, %c0_41], %34 {strides = array<i32>} : memref<1x1x16x8x32xf32, #tpu.memory_space<vmem>>, vector<1x1x1x8x32xf32>,
    %c0_42 = arith.constant 0 : index
    %c2 = arith.constant 2 : index
    %c0_43 = arith.constant 0 : index
    %c0_44 = arith.constant 0 : index
    %35 = vector.load %arg4[%c0_42, %c2, %c0_43, %c0_44] : memref<1x16x8x16xf32, #tpu.memory_space<vmem>>, vector<1x1x8x16xf32>
    %36 = vector.shape_cast %35 : vector<1x1x8x16xf32> to vector<8x16xf32>
    %37 = vector.extract_strided_slice %4 {offsets = [0, 16], sizes = [16, 8], strides = [1, 1]} : vector<64x128xf32> to vector<16x8xf32>
    %c0_45 = arith.constant 0 : index
    %c0_46 = arith.constant 0 : index
    %38 = vector.load %arg7[%c0_45, %c0_46] : memref<16x32xf32, #tpu.memory_space<vmem>>, vector<16x8xf32>
    tpu.vector_store %arg7[%c0_45, %c0_46], %37 {strides = array<i32>} : memref<16x32xf32, #tpu.memory_space<vmem>>, vector<16x8xf32>,
    %39 = vector.extract_strided_slice %4 {offsets = [16, 16], sizes = [16, 8], strides = [1, 1]} : vector<64x128xf32> to vector<16x8xf32>
    %c0_47 = arith.constant 0 : index
    %c8_48 = arith.constant 8 : index
    %40 = vector.load %arg7[%c0_47, %c8_48] : memref<16x32xf32, #tpu.memory_space<vmem>>, vector<16x8xf32>
    tpu.vector_store %arg7[%c0_47, %c8_48], %39 {strides = array<i32>} : memref<16x32xf32, #tpu.memory_space<vmem>>, vector<16x8xf32>,
    %41 = vector.extract_strided_slice %4 {offsets = [32, 16], sizes = [16, 8], strides = [1, 1]} : vector<64x128xf32> to vector<16x8xf32>
    %c0_49 = arith.constant 0 : index
    %c16_50 = arith.constant 16 : index
    %42 = vector.load %arg7[%c0_49, %c16_50] : memref<16x32xf32, #tpu.memory_space<vmem>>, vector<16x8xf32>
    tpu.vector_store %arg7[%c0_49, %c16_50], %41 {strides = array<i32>} : memref<16x32xf32, #tpu.memory_space<vmem>>, vector<16x8xf32>,
    %43 = vector.extract_strided_slice %4 {offsets = [48, 16], sizes = [16, 8], strides = [1, 1]} : vector<64x128xf32> to vector<16x8xf32>
    %c0_51 = arith.constant 0 : index
    %c24_52 = arith.constant 24 : index
    %44 = vector.load %arg7[%c0_51, %c24_52] : memref<16x32xf32, #tpu.memory_space<vmem>>, vector<16x8xf32>
    tpu.vector_store %arg7[%c0_51, %c24_52], %43 {strides = array<i32>} : memref<16x32xf32, #tpu.memory_space<vmem>>, vector<16x8xf32>,
    %c0_53 = arith.constant 0 : index
    %c0_54 = arith.constant 0 : index
    %45 = vector.load %arg7[%c0_53, %c0_54] : memref<16x32xf32, #tpu.memory_space<vmem>>, vector<16x32xf32>
    %cst_55 = arith.constant dense<0.000000e+00> : vector<8x32xf32>
    %46 = tpu.matmul %36, %45, %cst_55 {dimension_numbers = #tpu.dot_dimension_numbers<[1], [0], [0], [1], [0, 0, 1, 1], [], []>} : vector<8x16xf32>, vector<16x32xf32>, vector<8x32xf32> -> vector<8x32xf32>
    %c0_56 = arith.constant 0 : index
    %c0_57 = arith.constant 0 : index
    %c2_58 = arith.constant 2 : index
    %c0_59 = arith.constant 0 : index
    %c0_60 = arith.constant 0 : index
    %47 = vector.load %arg6[%c0_56, %c0_57, %c2_58, %c0_59, %c0_60] : memref<1x1x16x8x32xf32, #tpu.memory_space<vmem>>, vector<1x1x1x8x32xf32>
    %48 = vector.shape_cast %47 : vector<1x1x1x8x32xf32> to vector<8x32xf32>
    %49 = vector.shape_cast %46 : vector<8x32xf32> to vector<1x1x1x8x32xf32>
    tpu.vector_store %arg6[%c0_56, %c0_57, %c2_58, %c0_59, %c0_60], %49 {strides = array<i32>} : memref<1x1x16x8x32xf32, #tpu.memory_space<vmem>>, vector<1x1x1x8x32xf32>,
    %c0_61 = arith.constant 0 : index
    %c3 = arith.constant 3 : index
    %c0_62 = arith.constant 0 : index
    %c0_63 = arith.constant 0 : index
    %50 = vector.load %arg4[%c0_61, %c3, %c0_62, %c0_63] : memref<1x16x8x16xf32, #tpu.memory_space<vmem>>, vector<1x1x8x16xf32>
    %51 = vector.shape_cast %50 : vector<1x1x8x16xf32> to vector<8x16xf32>
    %52 = vector.extract_strided_slice %4 {offsets = [0, 24], sizes = [16, 8], strides = [1, 1]} : vector<64x128xf32> to vector<16x8xf32>
    %c0_64 = arith.constant 0 : index
    %c0_65 = arith.constant 0 : index
    %53 = vector.load %arg7[%c0_64, %c0_65] : memref<16x32xf32, #tpu.memory_space<vmem>>, vector<16x8xf32>
    tpu.vector_store %arg7[%c0_64, %c0_65], %52 {strides = array<i32>} : memref<16x32xf32, #tpu.memory_space<vmem>>, vector<16x8xf32>,
    %54 = vector.extract_strided_slice %4 {offsets = [16, 24], sizes = [16, 8], strides = [1, 1]} : vector<64x128xf32> to vector<16x8xf32>
    %c0_66 = arith.constant 0 : index
    %c8_67 = arith.constant 8 : index
    %55 = vector.load %arg7[%c0_66, %c8_67] : memref<16x32xf32, #tpu.memory_space<vmem>>, vector<16x8xf32>
    tpu.vector_store %arg7[%c0_66, %c8_67], %54 {strides = array<i32>} : memref<16x32xf32, #tpu.memory_space<vmem>>, vector<16x8xf32>,
    %56 = vector.extract_strided_slice %4 {offsets = [32, 24], sizes = [16, 8], strides = [1, 1]} : vector<64x128xf32> to vector<16x8xf32>
    %c0_68 = arith.constant 0 : index
    %c16_69 = arith.constant 16 : index
    %57 = vector.load %arg7[%c0_68, %c16_69] : memref<16x32xf32, #tpu.memory_space<vmem>>, vector<16x8xf32>
    tpu.vector_store %arg7[%c0_68, %c16_69], %56 {strides = array<i32>} : memref<16x32xf32, #tpu.memory_space<vmem>>, vector<16x8xf32>,
    %58 = vector.extract_strided_slice %4 {offsets = [48, 24], sizes = [16, 8], strides = [1, 1]} : vector<64x128xf32> to vector<16x8xf32>
    %c0_70 = arith.constant 0 : index
    %c24_71 = arith.constant 24 : index
    %59 = vector.load %arg7[%c0_70, %c24_71] : memref<16x32xf32, #tpu.memory_space<vmem>>, vector<16x8xf32>
    tpu.vector_store %arg7[%c0_70, %c24_71], %58 {strides = array<i32>} : memref<16x32xf32, #tpu.memory_space<vmem>>, vector<16x8xf32>,
    %c0_72 = arith.constant 0 : index
    %c0_73 = arith.constant 0 : index
    %60 = vector.load %arg7[%c0_72, %c0_73] : memref<16x32xf32, #tpu.memory_space<vmem>>, vector<16x32xf32>
    %cst_74 = arith.constant dense<0.000000e+00> : vector<8x32xf32>
    %61 = tpu.matmul %51, %60, %cst_74 {dimension_numbers = #tpu.dot_dimension_numbers<[1], [0], [0], [1], [0, 0, 1, 1], [], []>} : vector<8x16xf32>, vector<16x32xf32>, vector<8x32xf32> -> vector<8x32xf32>
    %c0_75 = arith.constant 0 : index
    %c0_76 = arith.constant 0 : index
    %c3_77 = arith.constant 3 : index
    %c0_78 = arith.constant 0 : index
    %c0_79 = arith.constant 0 : index
    %62 = vector.load %arg6[%c0_75, %c0_76, %c3_77, %c0_78, %c0_79] : memref<1x1x16x8x32xf32, #tpu.memory_space<vmem>>, vector<1x1x1x8x32xf32>
    %63 = vector.shape_cast %62 : vector<1x1x1x8x32xf32> to vector<8x32xf32>
    %64 = vector.shape_cast %61 : vector<8x32xf32> to vector<1x1x1x8x32xf32>
    tpu.vector_store %arg6[%c0_75, %c0_76, %c3_77, %c0_78, %c0_79], %64 {strides = array<i32>} : memref<1x1x16x8x32xf32, #tpu.memory_space<vmem>>, vector<1x1x1x8x32xf32>,
    %c0_80 = arith.constant 0 : index
    %c4 = arith.constant 4 : index
    %c0_81 = arith.constant 0 : index
    %c0_82 = arith.constant 0 : index
    %65 = vector.load %arg4[%c0_80, %c4, %c0_81, %c0_82] : memref<1x16x8x16xf32, #tpu.memory_space<vmem>>, vector<1x1x8x16xf32>
    %66 = vector.shape_cast %65 : vector<1x1x8x16xf32> to vector<8x16xf32>
    %67 = vector.extract_strided_slice %4 {offsets = [0, 32], sizes = [16, 8], strides = [1, 1]} : vector<64x128xf32> to vector<16x8xf32>
    %c0_83 = arith.constant 0 : index
    %c0_84 = arith.constant 0 : index
    %68 = vector.load %arg7[%c0_83, %c0_84] : memref<16x32xf32, #tpu.memory_space<vmem>>, vector<16x8xf32>
    tpu.vector_store %arg7[%c0_83, %c0_84], %67 {strides = array<i32>} : memref<16x32xf32, #tpu.memory_space<vmem>>, vector<16x8xf32>,
    %69 = vector.extract_strided_slice %4 {offsets = [16, 32], sizes = [16, 8], strides = [1, 1]} : vector<64x128xf32> to vector<16x8xf32>
    %c0_85 = arith.constant 0 : index
    %c8_86 = arith.constant 8 : index
    %70 = vector.load %arg7[%c0_85, %c8_86] : memref<16x32xf32, #tpu.memory_space<vmem>>, vector<16x8xf32>
    tpu.vector_store %arg7[%c0_85, %c8_86], %69 {strides = array<i32>} : memref<16x32xf32, #tpu.memory_space<vmem>>, vector<16x8xf32>,
    %71 = vector.extract_strided_slice %4 {offsets = [32, 32], sizes = [16, 8], strides = [1, 1]} : vector<64x128xf32> to vector<16x8xf32>
    %c0_87 = arith.constant 0 : index
    %c16_88 = arith.constant 16 : index
    %72 = vector.load %arg7[%c0_87, %c16_88] : memref<16x32xf32, #tpu.memory_space<vmem>>, vector<16x8xf32>
    tpu.vector_store %arg7[%c0_87, %c16_88], %71 {strides = array<i32>} : memref<16x32xf32, #tpu.memory_space<vmem>>, vector<16x8xf32>,
    %73 = vector.extract_strided_slice %4 {offsets = [48, 32], sizes = [16, 8], strides = [1, 1]} : vector<64x128xf32> to vector<16x8xf32>
    %c0_89 = arith.constant 0 : index
    %c24_90 = arith.constant 24 : index
    %74 = vector.load %arg7[%c0_89, %c24_90] : memref<16x32xf32, #tpu.memory_space<vmem>>, vector<16x8xf32>
    tpu.vector_store %arg7[%c0_89, %c24_90], %73 {strides = array<i32>} : memref<16x32xf32, #tpu.memory_space<vmem>>, vector<16x8xf32>,
    %c0_91 = arith.constant 0 : index
    %c0_92 = arith.constant 0 : index
    %75 = vector.load %arg7[%c0_91, %c0_92] : memref<16x32xf32, #tpu.memory_space<vmem>>, vector<16x32xf32>
    %cst_93 = arith.constant dense<0.000000e+00> : vector<8x32xf32>
    %76 = tpu.matmul %66, %75, %cst_93 {dimension_numbers = #tpu.dot_dimension_numbers<[1], [0], [0], [1], [0, 0, 1, 1], [], []>} : vector<8x16xf32>, vector<16x32xf32>, vector<8x32xf32> -> vector<8x32xf32>
    %c0_94 = arith.constant 0 : index
    %c0_95 = arith.constant 0 : index
    %c4_96 = arith.constant 4 : index
    %c0_97 = arith.constant 0 : index
    %c0_98 = arith.constant 0 : index
    %77 = vector.load %arg6[%c0_94, %c0_95, %c4_96, %c0_97, %c0_98] : memref<1x1x16x8x32xf32, #tpu.memory_space<vmem>>, vector<1x1x1x8x32xf32>
    %78 = vector.shape_cast %77 : vector<1x1x1x8x32xf32> to vector<8x32xf32>
    %79 = vector.shape_cast %76 : vector<8x32xf32> to vector<1x1x1x8x32xf32>
    tpu.vector_store %arg6[%c0_94, %c0_95, %c4_96, %c0_97, %c0_98], %79 {strides = array<i32>} : memref<1x1x16x8x32xf32, #tpu.memory_space<vmem>>, vector<1x1x1x8x32xf32>,
    %c0_99 = arith.constant 0 : index
    %c5 = arith.constant 5 : index
    %c0_100 = arith.constant 0 : index
    %c0_101 = arith.constant 0 : index
    %80 = vector.load %arg4[%c0_99, %c5, %c0_100, %c0_101] : memref<1x16x8x16xf32, #tpu.memory_space<vmem>>, vector<1x1x8x16xf32>
    %81 = vector.shape_cast %80 : vector<1x1x8x16xf32> to vector<8x16xf32>
    %82 = vector.extract_strided_slice %4 {offsets = [0, 40], sizes = [16, 8], strides = [1, 1]} : vector<64x128xf32> to vector<16x8xf32>
    %c0_102 = arith.constant 0 : index
    %c0_103 = arith.constant 0 : index
    %83 = vector.load %arg7[%c0_102, %c0_103] : memref<16x32xf32, #tpu.memory_space<vmem>>, vector<16x8xf32>
    tpu.vector_store %arg7[%c0_102, %c0_103], %82 {strides = array<i32>} : memref<16x32xf32, #tpu.memory_space<vmem>>, vector<16x8xf32>,
    %84 = vector.extract_strided_slice %4 {offsets = [16, 40], sizes = [16, 8], strides = [1, 1]} : vector<64x128xf32> to vector<16x8xf32>
    %c0_104 = arith.constant 0 : index
    %c8_105 = arith.constant 8 : index
    %85 = vector.load %arg7[%c0_104, %c8_105] : memref<16x32xf32, #tpu.memory_space<vmem>>, vector<16x8xf32>
    tpu.vector_store %arg7[%c0_104, %c8_105], %84 {strides = array<i32>} : memref<16x32xf32, #tpu.memory_space<vmem>>, vector<16x8xf32>,
    %86 = vector.extract_strided_slice %4 {offsets = [32, 40], sizes = [16, 8], strides = [1, 1]} : vector<64x128xf32> to vector<16x8xf32>
    %c0_106 = arith.constant 0 : index
    %c16_107 = arith.constant 16 : index
    %87 = vector.load %arg7[%c0_106, %c16_107] : memref<16x32xf32, #tpu.memory_space<vmem>>, vector<16x8xf32>
    tpu.vector_store %arg7[%c0_106, %c16_107], %86 {strides = array<i32>} : memref<16x32xf32, #tpu.memory_space<vmem>>, vector<16x8xf32>,
    %88 = vector.extract_strided_slice %4 {offsets = [48, 40], sizes = [16, 8], strides = [1, 1]} : vector<64x128xf32> to vector<16x8xf32>
    %c0_108 = arith.constant 0 : index
    %c24_109 = arith.constant 24 : index
    %89 = vector.load %arg7[%c0_108, %c24_109] : memref<16x32xf32, #tpu.memory_space<vmem>>, vector<16x8xf32>
    tpu.vector_store %arg7[%c0_108, %c24_109], %88 {strides = array<i32>} : memref<16x32xf32, #tpu.memory_space<vmem>>, vector<16x8xf32>,
    %c0_110 = arith.constant 0 : index
    %c0_111 = arith.constant 0 : index
    %90 = vector.load %arg7[%c0_110, %c0_111] : memref<16x32xf32, #tpu.memory_space<vmem>>, vector<16x32xf32>
    %cst_112 = arith.constant dense<0.000000e+00> : vector<8x32xf32>
    %91 = tpu.matmul %81, %90, %cst_112 {dimension_numbers = #tpu.dot_dimension_numbers<[1], [0], [0], [1], [0, 0, 1, 1], [], []>} : vector<8x16xf32>, vector<16x32xf32>, vector<8x32xf32> -> vector<8x32xf32>
    %c0_113 = arith.constant 0 : index
    %c0_114 = arith.constant 0 : index
    %c5_115 = arith.constant 5 : index
    %c0_116 = arith.constant 0 : index
    %c0_117 = arith.constant 0 : index
    %92 = vector.load %arg6[%c0_113, %c0_114, %c5_115, %c0_116, %c0_117] : memref<1x1x16x8x32xf32, #tpu.memory_space<vmem>>, vector<1x1x1x8x32xf32>
    %93 = vector.shape_cast %92 : vector<1x1x1x8x32xf32> to vector<8x32xf32>
    %94 = vector.shape_cast %91 : vector<8x32xf32> to vector<1x1x1x8x32xf32>
    tpu.vector_store %arg6[%c0_113, %c0_114, %c5_115, %c0_116, %c0_117], %94 {strides = array<i32>} : memref<1x1x16x8x32xf32, #tpu.memory_space<vmem>>, vector<1x1x1x8x32xf32>,
    %c0_118 = arith.constant 0 : index
    %c6 = arith.constant 6 : index
    %c0_119 = arith.constant 0 : index
    %c0_120 = arith.constant 0 : index
    %95 = vector.load %arg4[%c0_118, %c6, %c0_119, %c0_120] : memref<1x16x8x16xf32, #tpu.memory_space<vmem>>, vector<1x1x8x16xf32>
    %96 = vector.shape_cast %95 : vector<1x1x8x16xf32> to vector<8x16xf32>
    %97 = vector.extract_strided_slice %4 {offsets = [0, 48], sizes = [16, 8], strides = [1, 1]} : vector<64x128xf32> to vector<16x8xf32>
    %c0_121 = arith.constant 0 : index
    %c0_122 = arith.constant 0 : index
    %98 = vector.load %arg7[%c0_121, %c0_122] : memref<16x32xf32, #tpu.memory_space<vmem>>, vector<16x8xf32>
    tpu.vector_store %arg7[%c0_121, %c0_122], %97 {strides = array<i32>} : memref<16x32xf32, #tpu.memory_space<vmem>>, vector<16x8xf32>,
    %99 = vector.extract_strided_slice %4 {offsets = [16, 48], sizes = [16, 8], strides = [1, 1]} : vector<64x128xf32> to vector<16x8xf32>
    %c0_123 = arith.constant 0 : index
    %c8_124 = arith.constant 8 : index
    %100 = vector.load %arg7[%c0_123, %c8_124] : memref<16x32xf32, #tpu.memory_space<vmem>>, vector<16x8xf32>
    tpu.vector_store %arg7[%c0_123, %c8_124], %99 {strides = array<i32>} : memref<16x32xf32, #tpu.memory_space<vmem>>, vector<16x8xf32>,
    %101 = vector.extract_strided_slice %4 {offsets = [32, 48], sizes = [16, 8], strides = [1, 1]} : vector<64x128xf32> to vector<16x8xf32>
    %c0_125 = arith.constant 0 : index
    %c16_126 = arith.constant 16 : index
    %102 = vector.load %arg7[%c0_125, %c16_126] : memref<16x32xf32, #tpu.memory_space<vmem>>, vector<16x8xf32>
    tpu.vector_store %arg7[%c0_125, %c16_126], %101 {strides = array<i32>} : memref<16x32xf32, #tpu.memory_space<vmem>>, vector<16x8xf32>,
    %103 = vector.extract_strided_slice %4 {offsets = [48, 48], sizes = [16, 8], strides = [1, 1]} : vector<64x128xf32> to vector<16x8xf32>
    %c0_127 = arith.constant 0 : index
    %c24_128 = arith.constant 24 : index
    %104 = vector.load %arg7[%c0_127, %c24_128] : memref<16x32xf32, #tpu.memory_space<vmem>>, vector<16x8xf32>
    tpu.vector_store %arg7[%c0_127, %c24_128], %103 {strides = array<i32>} : memref<16x32xf32, #tpu.memory_space<vmem>>, vector<16x8xf32>,
    %c0_129 = arith.constant 0 : index
    %c0_130 = arith.constant 0 : index
    %105 = vector.load %arg7[%c0_129, %c0_130] : memref<16x32xf32, #tpu.memory_space<vmem>>, vector<16x32xf32>
    %cst_131 = arith.constant dense<0.000000e+00> : vector<8x32xf32>
    %106 = tpu.matmul %96, %105, %cst_131 {dimension_numbers = #tpu.dot_dimension_numbers<[1], [0], [0], [1], [0, 0, 1, 1], [], []>} : vector<8x16xf32>, vector<16x32xf32>, vector<8x32xf32> -> vector<8x32xf32>
    %c0_132 = arith.constant 0 : index
    %c0_133 = arith.constant 0 : index
    %c6_134 = arith.constant 6 : index
    %c0_135 = arith.constant 0 : index
    %c0_136 = arith.constant 0 : index
    %107 = vector.load %arg6[%c0_132, %c0_133, %c6_134, %c0_135, %c0_136] : memref<1x1x16x8x32xf32, #tpu.memory_space<vmem>>, vector<1x1x1x8x32xf32>
    %108 = vector.shape_cast %107 : vector<1x1x1x8x32xf32> to vector<8x32xf32>
    %109 = vector.shape_cast %106 : vector<8x32xf32> to vector<1x1x1x8x32xf32>
    tpu.vector_store %arg6[%c0_132, %c0_133, %c6_134, %c0_135, %c0_136], %109 {strides = array<i32>} : memref<1x1x16x8x32xf32, #tpu.memory_space<vmem>>, vector<1x1x1x8x32xf32>,
    %c0_137 = arith.constant 0 : index
    %c7 = arith.constant 7 : index
    %c0_138 = arith.constant 0 : index
    %c0_139 = arith.constant 0 : index
    %110 = vector.load %arg4[%c0_137, %c7, %c0_138, %c0_139] : memref<1x16x8x16xf32, #tpu.memory_space<vmem>>, vector<1x1x8x16xf32>
    %111 = vector.shape_cast %110 : vector<1x1x8x16xf32> to vector<8x16xf32>
    %112 = vector.extract_strided_slice %4 {offsets = [0, 56], sizes = [16, 8], strides = [1, 1]} : vector<64x128xf32> to vector<16x8xf32>
    %c0_140 = arith.constant 0 : index
    %c0_141 = arith.constant 0 : index
    %113 = vector.load %arg7[%c0_140, %c0_141] : memref<16x32xf32, #tpu.memory_space<vmem>>, vector<16x8xf32>
    tpu.vector_store %arg7[%c0_140, %c0_141], %112 {strides = array<i32>} : memref<16x32xf32, #tpu.memory_space<vmem>>, vector<16x8xf32>,
    %114 = vector.extract_strided_slice %4 {offsets = [16, 56], sizes = [16, 8], strides = [1, 1]} : vector<64x128xf32> to vector<16x8xf32>
    %c0_142 = arith.constant 0 : index
    %c8_143 = arith.constant 8 : index
    %115 = vector.load %arg7[%c0_142, %c8_143] : memref<16x32xf32, #tpu.memory_space<vmem>>, vector<16x8xf32>
    tpu.vector_store %arg7[%c0_142, %c8_143], %114 {strides = array<i32>} : memref<16x32xf32, #tpu.memory_space<vmem>>, vector<16x8xf32>,
    %116 = vector.extract_strided_slice %4 {offsets = [32, 56], sizes = [16, 8], strides = [1, 1]} : vector<64x128xf32> to vector<16x8xf32>
    %c0_144 = arith.constant 0 : index
    %c16_145 = arith.constant 16 : index
    %117 = vector.load %arg7[%c0_144, %c16_145] : memref<16x32xf32, #tpu.memory_space<vmem>>, vector<16x8xf32>
    tpu.vector_store %arg7[%c0_144, %c16_145], %116 {strides = array<i32>} : memref<16x32xf32, #tpu.memory_space<vmem>>, vector<16x8xf32>,
    %118 = vector.extract_strided_slice %4 {offsets = [48, 56], sizes = [16, 8], strides = [1, 1]} : vector<64x128xf32> to vector<16x8xf32>
    %c0_146 = arith.constant 0 : index
    %c24_147 = arith.constant 24 : index
    %119 = vector.load %arg7[%c0_146, %c24_147] : memref<16x32xf32, #tpu.memory_space<vmem>>, vector<16x8xf32>
    tpu.vector_store %arg7[%c0_146, %c24_147], %118 {strides = array<i32>} : memref<16x32xf32, #tpu.memory_space<vmem>>, vector<16x8xf32>,
    %c0_148 = arith.constant 0 : index
    %c0_149 = arith.constant 0 : index
    %120 = vector.load %arg7[%c0_148, %c0_149] : memref<16x32xf32, #tpu.memory_space<vmem>>, vector<16x32xf32>
    %cst_150 = arith.constant dense<0.000000e+00> : vector<8x32xf32>
    %121 = tpu.matmul %111, %120, %cst_150 {dimension_numbers = #tpu.dot_dimension_numbers<[1], [0], [0], [1], [0, 0, 1, 1], [], []>} : vector<8x16xf32>, vector<16x32xf32>, vector<8x32xf32> -> vector<8x32xf32>
    %c0_151 = arith.constant 0 : index
    %c0_152 = arith.constant 0 : index
    %c7_153 = arith.constant 7 : index
    %c0_154 = arith.constant 0 : index
    %c0_155 = arith.constant 0 : index
    %122 = vector.load %arg6[%c0_151, %c0_152, %c7_153, %c0_154, %c0_155] : memref<1x1x16x8x32xf32, #tpu.memory_space<vmem>>, vector<1x1x1x8x32xf32>
    %123 = vector.shape_cast %122 : vector<1x1x1x8x32xf32> to vector<8x32xf32>
    %124 = vector.shape_cast %121 : vector<8x32xf32> to vector<1x1x1x8x32xf32>
    tpu.vector_store %arg6[%c0_151, %c0_152, %c7_153, %c0_154, %c0_155], %124 {strides = array<i32>} : memref<1x1x16x8x32xf32, #tpu.memory_space<vmem>>, vector<1x1x1x8x32xf32>,
    %c0_156 = arith.constant 0 : index
    %c8_157 = arith.constant 8 : index
    %c0_158 = arith.constant 0 : index
    %c0_159 = arith.constant 0 : index
    %125 = vector.load %arg4[%c0_156, %c8_157, %c0_158, %c0_159] : memref<1x16x8x16xf32, #tpu.memory_space<vmem>>, vector<1x1x8x16xf32>
    %126 = vector.shape_cast %125 : vector<1x1x8x16xf32> to vector<8x16xf32>
    %127 = vector.extract_strided_slice %4 {offsets = [0, 64], sizes = [16, 8], strides = [1, 1]} : vector<64x128xf32> to vector<16x8xf32>
    %c0_160 = arith.constant 0 : index
    %c0_161 = arith.constant 0 : index
    %128 = vector.load %arg7[%c0_160, %c0_161] : memref<16x32xf32, #tpu.memory_space<vmem>>, vector<16x8xf32>
    tpu.vector_store %arg7[%c0_160, %c0_161], %127 {strides = array<i32>} : memref<16x32xf32, #tpu.memory_space<vmem>>, vector<16x8xf32>,
    %129 = vector.extract_strided_slice %4 {offsets = [16, 64], sizes = [16, 8], strides = [1, 1]} : vector<64x128xf32> to vector<16x8xf32>
    %c0_162 = arith.constant 0 : index
    %c8_163 = arith.constant 8 : index
    %130 = vector.load %arg7[%c0_162, %c8_163] : memref<16x32xf32, #tpu.memory_space<vmem>>, vector<16x8xf32>
    tpu.vector_store %arg7[%c0_162, %c8_163], %129 {strides = array<i32>} : memref<16x32xf32, #tpu.memory_space<vmem>>, vector<16x8xf32>,
    %131 = vector.extract_strided_slice %4 {offsets = [32, 64], sizes = [16, 8], strides = [1, 1]} : vector<64x128xf32> to vector<16x8xf32>
    %c0_164 = arith.constant 0 : index
    %c16_165 = arith.constant 16 : index
    %132 = vector.load %arg7[%c0_164, %c16_165] : memref<16x32xf32, #tpu.memory_space<vmem>>, vector<16x8xf32>
    tpu.vector_store %arg7[%c0_164, %c16_165], %131 {strides = array<i32>} : memref<16x32xf32, #tpu.memory_space<vmem>>, vector<16x8xf32>,
    %133 = vector.extract_strided_slice %4 {offsets = [48, 64], sizes = [16, 8], strides = [1, 1]} : vector<64x128xf32> to vector<16x8xf32>
    %c0_166 = arith.constant 0 : index
    %c24_167 = arith.constant 24 : index
    %134 = vector.load %arg7[%c0_166, %c24_167] : memref<16x32xf32, #tpu.memory_space<vmem>>, vector<16x8xf32>
    tpu.vector_store %arg7[%c0_166, %c24_167], %133 {strides = array<i32>} : memref<16x32xf32, #tpu.memory_space<vmem>>, vector<16x8xf32>,
    %c0_168 = arith.constant 0 : index
    %c0_169 = arith.constant 0 : index
    %135 = vector.load %arg7[%c0_168, %c0_169] : memref<16x32xf32, #tpu.memory_space<vmem>>, vector<16x32xf32>
    %cst_170 = arith.constant dense<0.000000e+00> : vector<8x32xf32>
    %136 = tpu.matmul %126, %135, %cst_170 {dimension_numbers = #tpu.dot_dimension_numbers<[1], [0], [0], [1], [0, 0, 1, 1], [], []>} : vector<8x16xf32>, vector<16x32xf32>, vector<8x32xf32> -> vector<8x32xf32>
    %c0_171 = arith.constant 0 : index
    %c0_172 = arith.constant 0 : index
    %c8_173 = arith.constant 8 : index
    %c0_174 = arith.constant 0 : index
    %c0_175 = arith.constant 0 : index
    %137 = vector.load %arg6[%c0_171, %c0_172, %c8_173, %c0_174, %c0_175] : memref<1x1x16x8x32xf32, #tpu.memory_space<vmem>>, vector<1x1x1x8x32xf32>
    %138 = vector.shape_cast %137 : vector<1x1x1x8x32xf32> to vector<8x32xf32>
    %139 = vector.shape_cast %136 : vector<8x32xf32> to vector<1x1x1x8x32xf32>
    tpu.vector_store %arg6[%c0_171, %c0_172, %c8_173, %c0_174, %c0_175], %139 {strides = array<i32>} : memref<1x1x16x8x32xf32, #tpu.memory_space<vmem>>, vector<1x1x1x8x32xf32>,
    %c0_176 = arith.constant 0 : index
    %c9 = arith.constant 9 : index
    %c0_177 = arith.constant 0 : index
    %c0_178 = arith.constant 0 : index
    %140 = vector.load %arg4[%c0_176, %c9, %c0_177, %c0_178] : memref<1x16x8x16xf32, #tpu.memory_space<vmem>>, vector<1x1x8x16xf32>
    %141 = vector.shape_cast %140 : vector<1x1x8x16xf32> to vector<8x16xf32>
    %142 = vector.extract_strided_slice %4 {offsets = [0, 72], sizes = [16, 8], strides = [1, 1]} : vector<64x128xf32> to vector<16x8xf32>
    %c0_179 = arith.constant 0 : index
    %c0_180 = arith.constant 0 : index
    %143 = vector.load %arg7[%c0_179, %c0_180] : memref<16x32xf32, #tpu.memory_space<vmem>>, vector<16x8xf32>
    tpu.vector_store %arg7[%c0_179, %c0_180], %142 {strides = array<i32>} : memref<16x32xf32, #tpu.memory_space<vmem>>, vector<16x8xf32>,
    %144 = vector.extract_strided_slice %4 {offsets = [16, 72], sizes = [16, 8], strides = [1, 1]} : vector<64x128xf32> to vector<16x8xf32>
    %c0_181 = arith.constant 0 : index
    %c8_182 = arith.constant 8 : index
    %145 = vector.load %arg7[%c0_181, %c8_182] : memref<16x32xf32, #tpu.memory_space<vmem>>, vector<16x8xf32>
    tpu.vector_store %arg7[%c0_181, %c8_182], %144 {strides = array<i32>} : memref<16x32xf32, #tpu.memory_space<vmem>>, vector<16x8xf32>,
    %146 = vector.extract_strided_slice %4 {offsets = [32, 72], sizes = [16, 8], strides = [1, 1]} : vector<64x128xf32> to vector<16x8xf32>
    %c0_183 = arith.constant 0 : index
    %c16_184 = arith.constant 16 : index
    %147 = vector.load %arg7[%c0_183, %c16_184] : memref<16x32xf32, #tpu.memory_space<vmem>>, vector<16x8xf32>
    tpu.vector_store %arg7[%c0_183, %c16_184], %146 {strides = array<i32>} : memref<16x32xf32, #tpu.memory_space<vmem>>, vector<16x8xf32>,
    %148 = vector.extract_strided_slice %4 {offsets = [48, 72], sizes = [16, 8], strides = [1, 1]} : vector<64x128xf32> to vector<16x8xf32>
    %c0_185 = arith.constant 0 : index
    %c24_186 = arith.constant 24 : index
    %149 = vector.load %arg7[%c0_185, %c24_186] : memref<16x32xf32, #tpu.memory_space<vmem>>, vector<16x8xf32>
    tpu.vector_store %arg7[%c0_185, %c24_186], %148 {strides = array<i32>} : memref<16x32xf32, #tpu.memory_space<vmem>>, vector<16x8xf32>,
    %c0_187 = arith.constant 0 : index
    %c0_188 = arith.constant 0 : index
    %150 = vector.load %arg7[%c0_187, %c0_188] : memref<16x32xf32, #tpu.memory_space<vmem>>, vector<16x32xf32>
    %cst_189 = arith.constant dense<0.000000e+00> : vector<8x32xf32>
    %151 = tpu.matmul %141, %150, %cst_189 {dimension_numbers = #tpu.dot_dimension_numbers<[1], [0], [0], [1], [0, 0, 1, 1], [], []>} : vector<8x16xf32>, vector<16x32xf32>, vector<8x32xf32> -> vector<8x32xf32>
    %c0_190 = arith.constant 0 : index
    %c0_191 = arith.constant 0 : index
    %c9_192 = arith.constant 9 : index
    %c0_193 = arith.constant 0 : index
    %c0_194 = arith.constant 0 : index
    %152 = vector.load %arg6[%c0_190, %c0_191, %c9_192, %c0_193, %c0_194] : memref<1x1x16x8x32xf32, #tpu.memory_space<vmem>>, vector<1x1x1x8x32xf32>
    %153 = vector.shape_cast %152 : vector<1x1x1x8x32xf32> to vector<8x32xf32>
    %154 = vector.shape_cast %151 : vector<8x32xf32> to vector<1x1x1x8x32xf32>
    tpu.vector_store %arg6[%c0_190, %c0_191, %c9_192, %c0_193, %c0_194], %154 {strides = array<i32>} : memref<1x1x16x8x32xf32, #tpu.memory_space<vmem>>, vector<1x1x1x8x32xf32>,
    %c0_195 = arith.constant 0 : index
    %c10 = arith.constant 10 : index
    %c0_196 = arith.constant 0 : index
    %c0_197 = arith.constant 0 : index
    %155 = vector.load %arg4[%c0_195, %c10, %c0_196, %c0_197] : memref<1x16x8x16xf32, #tpu.memory_space<vmem>>, vector<1x1x8x16xf32>
    %156 = vector.shape_cast %155 : vector<1x1x8x16xf32> to vector<8x16xf32>
    %157 = vector.extract_strided_slice %4 {offsets = [0, 80], sizes = [16, 8], strides = [1, 1]} : vector<64x128xf32> to vector<16x8xf32>
    %c0_198 = arith.constant 0 : index
    %c0_199 = arith.constant 0 : index
    %158 = vector.load %arg7[%c0_198, %c0_199] : memref<16x32xf32, #tpu.memory_space<vmem>>, vector<16x8xf32>
    tpu.vector_store %arg7[%c0_198, %c0_199], %157 {strides = array<i32>} : memref<16x32xf32, #tpu.memory_space<vmem>>, vector<16x8xf32>,
    %159 = vector.extract_strided_slice %4 {offsets = [16, 80], sizes = [16, 8], strides = [1, 1]} : vector<64x128xf32> to vector<16x8xf32>
    %c0_200 = arith.constant 0 : index
    %c8_201 = arith.constant 8 : index
    %160 = vector.load %arg7[%c0_200, %c8_201] : memref<16x32xf32, #tpu.memory_space<vmem>>, vector<16x8xf32>
    tpu.vector_store %arg7[%c0_200, %c8_201], %159 {strides = array<i32>} : memref<16x32xf32, #tpu.memory_space<vmem>>, vector<16x8xf32>,
    %161 = vector.extract_strided_slice %4 {offsets = [32, 80], sizes = [16, 8], strides = [1, 1]} : vector<64x128xf32> to vector<16x8xf32>
    %c0_202 = arith.constant 0 : index
    %c16_203 = arith.constant 16 : index
    %162 = vector.load %arg7[%c0_202, %c16_203] : memref<16x32xf32, #tpu.memory_space<vmem>>, vector<16x8xf32>
    tpu.vector_store %arg7[%c0_202, %c16_203], %161 {strides = array<i32>} : memref<16x32xf32, #tpu.memory_space<vmem>>, vector<16x8xf32>,
    %163 = vector.extract_strided_slice %4 {offsets = [48, 80], sizes = [16, 8], strides = [1, 1]} : vector<64x128xf32> to vector<16x8xf32>
    %c0_204 = arith.constant 0 : index
    %c24_205 = arith.constant 24 : index
    %164 = vector.load %arg7[%c0_204, %c24_205] : memref<16x32xf32, #tpu.memory_space<vmem>>, vector<16x8xf32>
    tpu.vector_store %arg7[%c0_204, %c24_205], %163 {strides = array<i32>} : memref<16x32xf32, #tpu.memory_space<vmem>>, vector<16x8xf32>,
    %c0_206 = arith.constant 0 : index
    %c0_207 = arith.constant 0 : index
    %165 = vector.load %arg7[%c0_206, %c0_207] : memref<16x32xf32, #tpu.memory_space<vmem>>, vector<16x32xf32>
    %cst_208 = arith.constant dense<0.000000e+00> : vector<8x32xf32>
    %166 = tpu.matmul %156, %165, %cst_208 {dimension_numbers = #tpu.dot_dimension_numbers<[1], [0], [0], [1], [0, 0, 1, 1], [], []>} : vector<8x16xf32>, vector<16x32xf32>, vector<8x32xf32> -> vector<8x32xf32>
    %c0_209 = arith.constant 0 : index
    %c0_210 = arith.constant 0 : index
    %c10_211 = arith.constant 10 : index
    %c0_212 = arith.constant 0 : index
    %c0_213 = arith.constant 0 : index
    %167 = vector.load %arg6[%c0_209, %c0_210, %c10_211, %c0_212, %c0_213] : memref<1x1x16x8x32xf32, #tpu.memory_space<vmem>>, vector<1x1x1x8x32xf32>
    %168 = vector.shape_cast %167 : vector<1x1x1x8x32xf32> to vector<8x32xf32>
    %169 = vector.shape_cast %166 : vector<8x32xf32> to vector<1x1x1x8x32xf32>
    tpu.vector_store %arg6[%c0_209, %c0_210, %c10_211, %c0_212, %c0_213], %169 {strides = array<i32>} : memref<1x1x16x8x32xf32, #tpu.memory_space<vmem>>, vector<1x1x1x8x32xf32>,
    %c0_214 = arith.constant 0 : index
    %c11 = arith.constant 11 : index
    %c0_215 = arith.constant 0 : index
    %c0_216 = arith.constant 0 : index
    %170 = vector.load %arg4[%c0_214, %c11, %c0_215, %c0_216] : memref<1x16x8x16xf32, #tpu.memory_space<vmem>>, vector<1x1x8x16xf32>
    %171 = vector.shape_cast %170 : vector<1x1x8x16xf32> to vector<8x16xf32>
    %172 = vector.extract_strided_slice %4 {offsets = [0, 88], sizes = [16, 8], strides = [1, 1]} : vector<64x128xf32> to vector<16x8xf32>
    %c0_217 = arith.constant 0 : index
    %c0_218 = arith.constant 0 : index
    %173 = vector.load %arg7[%c0_217, %c0_218] : memref<16x32xf32, #tpu.memory_space<vmem>>, vector<16x8xf32>
    tpu.vector_store %arg7[%c0_217, %c0_218], %172 {strides = array<i32>} : memref<16x32xf32, #tpu.memory_space<vmem>>, vector<16x8xf32>,
    %174 = vector.extract_strided_slice %4 {offsets = [16, 88], sizes = [16, 8], strides = [1, 1]} : vector<64x128xf32> to vector<16x8xf32>
    %c0_219 = arith.constant 0 : index
    %c8_220 = arith.constant 8 : index
    %175 = vector.load %arg7[%c0_219, %c8_220] : memref<16x32xf32, #tpu.memory_space<vmem>>, vector<16x8xf32>
    tpu.vector_store %arg7[%c0_219, %c8_220], %174 {strides = array<i32>} : memref<16x32xf32, #tpu.memory_space<vmem>>, vector<16x8xf32>,
    %176 = vector.extract_strided_slice %4 {offsets = [32, 88], sizes = [16, 8], strides = [1, 1]} : vector<64x128xf32> to vector<16x8xf32>
    %c0_221 = arith.constant 0 : index
    %c16_222 = arith.constant 16 : index
    %177 = vector.load %arg7[%c0_221, %c16_222] : memref<16x32xf32, #tpu.memory_space<vmem>>, vector<16x8xf32>
    tpu.vector_store %arg7[%c0_221, %c16_222], %176 {strides = array<i32>} : memref<16x32xf32, #tpu.memory_space<vmem>>, vector<16x8xf32>,
    %178 = vector.extract_strided_slice %4 {offsets = [48, 88], sizes = [16, 8], strides = [1, 1]} : vector<64x128xf32> to vector<16x8xf32>
    %c0_223 = arith.constant 0 : index
    %c24_224 = arith.constant 24 : index
    %179 = vector.load %arg7[%c0_223, %c24_224] : memref<16x32xf32, #tpu.memory_space<vmem>>, vector<16x8xf32>
    tpu.vector_store %arg7[%c0_223, %c24_224], %178 {strides = array<i32>} : memref<16x32xf32, #tpu.memory_space<vmem>>, vector<16x8xf32>,
    %c0_225 = arith.constant 0 : index
    %c0_226 = arith.constant 0 : index
    %180 = vector.load %arg7[%c0_225, %c0_226] : memref<16x32xf32, #tpu.memory_space<vmem>>, vector<16x32xf32>
    %cst_227 = arith.constant dense<0.000000e+00> : vector<8x32xf32>
    %181 = tpu.matmul %171, %180, %cst_227 {dimension_numbers = #tpu.dot_dimension_numbers<[1], [0], [0], [1], [0, 0, 1, 1], [], []>} : vector<8x16xf32>, vector<16x32xf32>, vector<8x32xf32> -> vector<8x32xf32>
    %c0_228 = arith.constant 0 : index
    %c0_229 = arith.constant 0 : index
    %c11_230 = arith.constant 11 : index
    %c0_231 = arith.constant 0 : index
    %c0_232 = arith.constant 0 : index
    %182 = vector.load %arg6[%c0_228, %c0_229, %c11_230, %c0_231, %c0_232] : memref<1x1x16x8x32xf32, #tpu.memory_space<vmem>>, vector<1x1x1x8x32xf32>
    %183 = vector.shape_cast %182 : vector<1x1x1x8x32xf32> to vector<8x32xf32>
    %184 = vector.shape_cast %181 : vector<8x32xf32> to vector<1x1x1x8x32xf32>
    tpu.vector_store %arg6[%c0_228, %c0_229, %c11_230, %c0_231, %c0_232], %184 {strides = array<i32>} : memref<1x1x16x8x32xf32, #tpu.memory_space<vmem>>, vector<1x1x1x8x32xf32>,
    %c0_233 = arith.constant 0 : index
    %c12 = arith.constant 12 : index
    %c0_234 = arith.constant 0 : index
    %c0_235 = arith.constant 0 : index
    %185 = vector.load %arg4[%c0_233, %c12, %c0_234, %c0_235] : memref<1x16x8x16xf32, #tpu.memory_space<vmem>>, vector<1x1x8x16xf32>
    %186 = vector.shape_cast %185 : vector<1x1x8x16xf32> to vector<8x16xf32>
    %187 = vector.extract_strided_slice %4 {offsets = [0, 96], sizes = [16, 8], strides = [1, 1]} : vector<64x128xf32> to vector<16x8xf32>
    %c0_236 = arith.constant 0 : index
    %c0_237 = arith.constant 0 : index
    %188 = vector.load %arg7[%c0_236, %c0_237] : memref<16x32xf32, #tpu.memory_space<vmem>>, vector<16x8xf32>
    tpu.vector_store %arg7[%c0_236, %c0_237], %187 {strides = array<i32>} : memref<16x32xf32, #tpu.memory_space<vmem>>, vector<16x8xf32>,
    %189 = vector.extract_strided_slice %4 {offsets = [16, 96], sizes = [16, 8], strides = [1, 1]} : vector<64x128xf32> to vector<16x8xf32>
    %c0_238 = arith.constant 0 : index
    %c8_239 = arith.constant 8 : index
    %190 = vector.load %arg7[%c0_238, %c8_239] : memref<16x32xf32, #tpu.memory_space<vmem>>, vector<16x8xf32>
    tpu.vector_store %arg7[%c0_238, %c8_239], %189 {strides = array<i32>} : memref<16x32xf32, #tpu.memory_space<vmem>>, vector<16x8xf32>,
    %191 = vector.extract_strided_slice %4 {offsets = [32, 96], sizes = [16, 8], strides = [1, 1]} : vector<64x128xf32> to vector<16x8xf32>
    %c0_240 = arith.constant 0 : index
    %c16_241 = arith.constant 16 : index
    %192 = vector.load %arg7[%c0_240, %c16_241] : memref<16x32xf32, #tpu.memory_space<vmem>>, vector<16x8xf32>
    tpu.vector_store %arg7[%c0_240, %c16_241], %191 {strides = array<i32>} : memref<16x32xf32, #tpu.memory_space<vmem>>, vector<16x8xf32>,
    %193 = vector.extract_strided_slice %4 {offsets = [48, 96], sizes = [16, 8], strides = [1, 1]} : vector<64x128xf32> to vector<16x8xf32>
    %c0_242 = arith.constant 0 : index
    %c24_243 = arith.constant 24 : index
    %194 = vector.load %arg7[%c0_242, %c24_243] : memref<16x32xf32, #tpu.memory_space<vmem>>, vector<16x8xf32>
    tpu.vector_store %arg7[%c0_242, %c24_243], %193 {strides = array<i32>} : memref<16x32xf32, #tpu.memory_space<vmem>>, vector<16x8xf32>,
    %c0_244 = arith.constant 0 : index
    %c0_245 = arith.constant 0 : index
    %195 = vector.load %arg7[%c0_244, %c0_245] : memref<16x32xf32, #tpu.memory_space<vmem>>, vector<16x32xf32>
    %cst_246 = arith.constant dense<0.000000e+00> : vector<8x32xf32>
    %196 = tpu.matmul %186, %195, %cst_246 {dimension_numbers = #tpu.dot_dimension_numbers<[1], [0], [0], [1], [0, 0, 1, 1], [], []>} : vector<8x16xf32>, vector<16x32xf32>, vector<8x32xf32> -> vector<8x32xf32>
    %c0_247 = arith.constant 0 : index
    %c0_248 = arith.constant 0 : index
    %c12_249 = arith.constant 12 : index
    %c0_250 = arith.constant 0 : index
    %c0_251 = arith.constant 0 : index
    %197 = vector.load %arg6[%c0_247, %c0_248, %c12_249, %c0_250, %c0_251] : memref<1x1x16x8x32xf32, #tpu.memory_space<vmem>>, vector<1x1x1x8x32xf32>
    %198 = vector.shape_cast %197 : vector<1x1x1x8x32xf32> to vector<8x32xf32>
    %199 = vector.shape_cast %196 : vector<8x32xf32> to vector<1x1x1x8x32xf32>
    tpu.vector_store %arg6[%c0_247, %c0_248, %c12_249, %c0_250, %c0_251], %199 {strides = array<i32>} : memref<1x1x16x8x32xf32, #tpu.memory_space<vmem>>, vector<1x1x1x8x32xf32>,
    %c0_252 = arith.constant 0 : index
    %c13 = arith.constant 13 : index
    %c0_253 = arith.constant 0 : index
    %c0_254 = arith.constant 0 : index
    %200 = vector.load %arg4[%c0_252, %c13, %c0_253, %c0_254] : memref<1x16x8x16xf32, #tpu.memory_space<vmem>>, vector<1x1x8x16xf32>
    %201 = vector.shape_cast %200 : vector<1x1x8x16xf32> to vector<8x16xf32>
    %202 = vector.extract_strided_slice %4 {offsets = [0, 104], sizes = [16, 8], strides = [1, 1]} : vector<64x128xf32> to vector<16x8xf32>
    %c0_255 = arith.constant 0 : index
    %c0_256 = arith.constant 0 : index
    %203 = vector.load %arg7[%c0_255, %c0_256] : memref<16x32xf32, #tpu.memory_space<vmem>>, vector<16x8xf32>
    tpu.vector_store %arg7[%c0_255, %c0_256], %202 {strides = array<i32>} : memref<16x32xf32, #tpu.memory_space<vmem>>, vector<16x8xf32>,
    %204 = vector.extract_strided_slice %4 {offsets = [16, 104], sizes = [16, 8], strides = [1, 1]} : vector<64x128xf32> to vector<16x8xf32>
    %c0_257 = arith.constant 0 : index
    %c8_258 = arith.constant 8 : index
    %205 = vector.load %arg7[%c0_257, %c8_258] : memref<16x32xf32, #tpu.memory_space<vmem>>, vector<16x8xf32>
    tpu.vector_store %arg7[%c0_257, %c8_258], %204 {strides = array<i32>} : memref<16x32xf32, #tpu.memory_space<vmem>>, vector<16x8xf32>,
    %206 = vector.extract_strided_slice %4 {offsets = [32, 104], sizes = [16, 8], strides = [1, 1]} : vector<64x128xf32> to vector<16x8xf32>
    %c0_259 = arith.constant 0 : index
    %c16_260 = arith.constant 16 : index
    %207 = vector.load %arg7[%c0_259, %c16_260] : memref<16x32xf32, #tpu.memory_space<vmem>>, vector<16x8xf32>
    tpu.vector_store %arg7[%c0_259, %c16_260], %206 {strides = array<i32>} : memref<16x32xf32, #tpu.memory_space<vmem>>, vector<16x8xf32>,
    %208 = vector.extract_strided_slice %4 {offsets = [48, 104], sizes = [16, 8], strides = [1, 1]} : vector<64x128xf32> to vector<16x8xf32>
    %c0_261 = arith.constant 0 : index
    %c24_262 = arith.constant 24 : index
    %209 = vector.load %arg7[%c0_261, %c24_262] : memref<16x32xf32, #tpu.memory_space<vmem>>, vector<16x8xf32>
    tpu.vector_store %arg7[%c0_261, %c24_262], %208 {strides = array<i32>} : memref<16x32xf32, #tpu.memory_space<vmem>>, vector<16x8xf32>,
    %c0_263 = arith.constant 0 : index
    %c0_264 = arith.constant 0 : index
    %210 = vector.load %arg7[%c0_263, %c0_264] : memref<16x32xf32, #tpu.memory_space<vmem>>, vector<16x32xf32>
    %cst_265 = arith.constant dense<0.000000e+00> : vector<8x32xf32>
    %211 = tpu.matmul %201, %210, %cst_265 {dimension_numbers = #tpu.dot_dimension_numbers<[1], [0], [0], [1], [0, 0, 1, 1], [], []>} : vector<8x16xf32>, vector<16x32xf32>, vector<8x32xf32> -> vector<8x32xf32>
    %c0_266 = arith.constant 0 : index
    %c0_267 = arith.constant 0 : index
    %c13_268 = arith.constant 13 : index
    %c0_269 = arith.constant 0 : index
    %c0_270 = arith.constant 0 : index
    %212 = vector.load %arg6[%c0_266, %c0_267, %c13_268, %c0_269, %c0_270] : memref<1x1x16x8x32xf32, #tpu.memory_space<vmem>>, vector<1x1x1x8x32xf32>
    %213 = vector.shape_cast %212 : vector<1x1x1x8x32xf32> to vector<8x32xf32>
    %214 = vector.shape_cast %211 : vector<8x32xf32> to vector<1x1x1x8x32xf32>
    tpu.vector_store %arg6[%c0_266, %c0_267, %c13_268, %c0_269, %c0_270], %214 {strides = array<i32>} : memref<1x1x16x8x32xf32, #tpu.memory_space<vmem>>, vector<1x1x1x8x32xf32>,
    %c0_271 = arith.constant 0 : index
    %c14 = arith.constant 14 : index
    %c0_272 = arith.constant 0 : index
    %c0_273 = arith.constant 0 : index
    %215 = vector.load %arg4[%c0_271, %c14, %c0_272, %c0_273] : memref<1x16x8x16xf32, #tpu.memory_space<vmem>>, vector<1x1x8x16xf32>
    %216 = vector.shape_cast %215 : vector<1x1x8x16xf32> to vector<8x16xf32>
    %217 = vector.extract_strided_slice %4 {offsets = [0, 112], sizes = [16, 8], strides = [1, 1]} : vector<64x128xf32> to vector<16x8xf32>
    %c0_274 = arith.constant 0 : index
    %c0_275 = arith.constant 0 : index
    %218 = vector.load %arg7[%c0_274, %c0_275] : memref<16x32xf32, #tpu.memory_space<vmem>>, vector<16x8xf32>
    tpu.vector_store %arg7[%c0_274, %c0_275], %217 {strides = array<i32>} : memref<16x32xf32, #tpu.memory_space<vmem>>, vector<16x8xf32>,
    %219 = vector.extract_strided_slice %4 {offsets = [16, 112], sizes = [16, 8], strides = [1, 1]} : vector<64x128xf32> to vector<16x8xf32>
    %c0_276 = arith.constant 0 : index
    %c8_277 = arith.constant 8 : index
    %220 = vector.load %arg7[%c0_276, %c8_277] : memref<16x32xf32, #tpu.memory_space<vmem>>, vector<16x8xf32>
    tpu.vector_store %arg7[%c0_276, %c8_277], %219 {strides = array<i32>} : memref<16x32xf32, #tpu.memory_space<vmem>>, vector<16x8xf32>,
    %221 = vector.extract_strided_slice %4 {offsets = [32, 112], sizes = [16, 8], strides = [1, 1]} : vector<64x128xf32> to vector<16x8xf32>
    %c0_278 = arith.constant 0 : index
    %c16_279 = arith.constant 16 : index
    %222 = vector.load %arg7[%c0_278, %c16_279] : memref<16x32xf32, #tpu.memory_space<vmem>>, vector<16x8xf32>
    tpu.vector_store %arg7[%c0_278, %c16_279], %221 {strides = array<i32>} : memref<16x32xf32, #tpu.memory_space<vmem>>, vector<16x8xf32>,
    %223 = vector.extract_strided_slice %4 {offsets = [48, 112], sizes = [16, 8], strides = [1, 1]} : vector<64x128xf32> to vector<16x8xf32>
    %c0_280 = arith.constant 0 : index
    %c24_281 = arith.constant 24 : index
    %224 = vector.load %arg7[%c0_280, %c24_281] : memref<16x32xf32, #tpu.memory_space<vmem>>, vector<16x8xf32>
    tpu.vector_store %arg7[%c0_280, %c24_281], %223 {strides = array<i32>} : memref<16x32xf32, #tpu.memory_space<vmem>>, vector<16x8xf32>,
    %c0_282 = arith.constant 0 : index
    %c0_283 = arith.constant 0 : index
    %225 = vector.load %arg7[%c0_282, %c0_283] : memref<16x32xf32, #tpu.memory_space<vmem>>, vector<16x32xf32>
    %cst_284 = arith.constant dense<0.000000e+00> : vector<8x32xf32>
    %226 = tpu.matmul %216, %225, %cst_284 {dimension_numbers = #tpu.dot_dimension_numbers<[1], [0], [0], [1], [0, 0, 1, 1], [], []>} : vector<8x16xf32>, vector<16x32xf32>, vector<8x32xf32> -> vector<8x32xf32>
    %c0_285 = arith.constant 0 : index
    %c0_286 = arith.constant 0 : index
    %c14_287 = arith.constant 14 : index
    %c0_288 = arith.constant 0 : index
    %c0_289 = arith.constant 0 : index
    %227 = vector.load %arg6[%c0_285, %c0_286, %c14_287, %c0_288, %c0_289] : memref<1x1x16x8x32xf32, #tpu.memory_space<vmem>>, vector<1x1x1x8x32xf32>
    %228 = vector.shape_cast %227 : vector<1x1x1x8x32xf32> to vector<8x32xf32>
    %229 = vector.shape_cast %226 : vector<8x32xf32> to vector<1x1x1x8x32xf32>
    tpu.vector_store %arg6[%c0_285, %c0_286, %c14_287, %c0_288, %c0_289], %229 {strides = array<i32>} : memref<1x1x16x8x32xf32, #tpu.memory_space<vmem>>, vector<1x1x1x8x32xf32>,
    %c0_290 = arith.constant 0 : index
    %c15 = arith.constant 15 : index
    %c0_291 = arith.constant 0 : index
    %c0_292 = arith.constant 0 : index
    %230 = vector.load %arg4[%c0_290, %c15, %c0_291, %c0_292] : memref<1x16x8x16xf32, #tpu.memory_space<vmem>>, vector<1x1x8x16xf32>
    %231 = vector.shape_cast %230 : vector<1x1x8x16xf32> to vector<8x16xf32>
    %232 = vector.extract_strided_slice %4 {offsets = [0, 120], sizes = [16, 8], strides = [1, 1]} : vector<64x128xf32> to vector<16x8xf32>
    %c0_293 = arith.constant 0 : index
    %c0_294 = arith.constant 0 : index
    %233 = vector.load %arg7[%c0_293, %c0_294] : memref<16x32xf32, #tpu.memory_space<vmem>>, vector<16x8xf32>
    tpu.vector_store %arg7[%c0_293, %c0_294], %232 {strides = array<i32>} : memref<16x32xf32, #tpu.memory_space<vmem>>, vector<16x8xf32>,
    %234 = vector.extract_strided_slice %4 {offsets = [16, 120], sizes = [16, 8], strides = [1, 1]} : vector<64x128xf32> to vector<16x8xf32>
    %c0_295 = arith.constant 0 : index
    %c8_296 = arith.constant 8 : index
    %235 = vector.load %arg7[%c0_295, %c8_296] : memref<16x32xf32, #tpu.memory_space<vmem>>, vector<16x8xf32>
    tpu.vector_store %arg7[%c0_295, %c8_296], %234 {strides = array<i32>} : memref<16x32xf32, #tpu.memory_space<vmem>>, vector<16x8xf32>,
    %236 = vector.extract_strided_slice %4 {offsets = [32, 120], sizes = [16, 8], strides = [1, 1]} : vector<64x128xf32> to vector<16x8xf32>
    %c0_297 = arith.constant 0 : index
    %c16_298 = arith.constant 16 : index
    %237 = vector.load %arg7[%c0_297, %c16_298] : memref<16x32xf32, #tpu.memory_space<vmem>>, vector<16x8xf32>
    tpu.vector_store %arg7[%c0_297, %c16_298], %236 {strides = array<i32>} : memref<16x32xf32, #tpu.memory_space<vmem>>, vector<16x8xf32>,
    %238 = vector.extract_strided_slice %4 {offsets = [48, 120], sizes = [16, 8], strides = [1, 1]} : vector<64x128xf32> to vector<16x8xf32>
    %c0_299 = arith.constant 0 : index
    %c24_300 = arith.constant 24 : index
    %239 = vector.load %arg7[%c0_299, %c24_300] : memref<16x32xf32, #tpu.memory_space<vmem>>, vector<16x8xf32>
    tpu.vector_store %arg7[%c0_299, %c24_300], %238 {strides = array<i32>} : memref<16x32xf32, #tpu.memory_space<vmem>>, vector<16x8xf32>,
    %c0_301 = arith.constant 0 : index
    %c0_302 = arith.constant 0 : index
    %240 = vector.load %arg7[%c0_301, %c0_302] : memref<16x32xf32, #tpu.memory_space<vmem>>, vector<16x32xf32>
    %cst_303 = arith.constant dense<0.000000e+00> : vector<8x32xf32>
    %241 = tpu.matmul %231, %240, %cst_303 {dimension_numbers = #tpu.dot_dimension_numbers<[1], [0], [0], [1], [0, 0, 1, 1], [], []>} : vector<8x16xf32>, vector<16x32xf32>, vector<8x32xf32> -> vector<8x32xf32>
    %c0_304 = arith.constant 0 : index
    %c0_305 = arith.constant 0 : index
    %c15_306 = arith.constant 15 : index
    %c0_307 = arith.constant 0 : index
    %c0_308 = arith.constant 0 : index
    %242 = vector.load %arg6[%c0_304, %c0_305, %c15_306, %c0_307, %c0_308] : memref<1x1x16x8x32xf32, #tpu.memory_space<vmem>>, vector<1x1x1x8x32xf32>
    %243 = vector.shape_cast %242 : vector<1x1x1x8x32xf32> to vector<8x32xf32>
    %244 = vector.shape_cast %241 : vector<8x32xf32> to vector<1x1x1x8x32xf32>
    tpu.vector_store %arg6[%c0_304, %c0_305, %c15_306, %c0_307, %c0_308], %244 {strides = array<i32>} : memref<1x1x16x8x32xf32, #tpu.memory_space<vmem>>, vector<1x1x1x8x32xf32>,
    return
  }
  func.func @transform_0(%arg0: i32, %arg1: i32, %arg2: memref<2xi32, #tpu.memory_space<smem>>) -> (i32, i32, i32, i32) {
    %0 = arith.index_cast %arg1 : i32 to index
    %1 = memref.load %arg2[%0] : memref<2xi32, #tpu.memory_space<smem>>
    %c0_i32 = arith.constant 0 : i32
    %c0_i32_0 = arith.constant 0 : i32
    %c0_i32_1 = arith.constant 0 : i32
    return %1, %arg0, %c0_i32, %c0_i32_0 : i32, i32, i32, i32
  }
  func.func @transform_1(%arg0: i32, %arg1: i32, %arg2: memref<2xi32, #tpu.memory_space<smem>>) -> (i32, i32, i32, i32) {
    %c0_i32 = arith.constant 0 : i32
    %c0_i32_0 = arith.constant 0 : i32
    %c0_i32_1 = arith.constant 0 : i32
    %c0_i32_2 = arith.constant 0 : i32
    return %arg1, %c0_i32, %c0_i32_0, %c0_i32_1 : i32, i32, i32, i32
  }
  func.func @transform_2(%arg0: i32, %arg1: i32, %arg2: memref<2xi32, #tpu.memory_space<smem>>) -> (i32, i32, i32) {
    %c0_i32 = arith.constant 0 : i32
    %c0_i32_0 = arith.constant 0 : i32
    %c0_i32_1 = arith.constant 0 : i32
    return %arg1, %c0_i32, %c0_i32_0 : i32, i32, i32
  }
  func.func @transform_3(%arg0: i32, %arg1: i32, %arg2: memref<2xi32, #tpu.memory_space<smem>>) -> (i32, i32, i32, i32, i32) {
    %c0_i32 = arith.constant 0 : i32
    %c0_i32_0 = arith.constant 0 : i32
    %c0_i32_1 = arith.constant 0 : i32
    %c0_i32_2 = arith.constant 0 : i32
    return %arg1, %arg0, %c0_i32, %c0_i32_0, %c0_i32_1 : i32, i32, i32, i32, i32
  }
}

</mosaic_0001>

<llo_original>
// kernel: tpu_custom_call.1
$region0: #{tpu_custom_call.1}
  #allocation0 [shape = 'u32[]', space=smem, size = 0x4, offset = 0x4, fixed_abs, tag = 'smem constant byte address 0x4 - core index']
  #allocation1 [shape = 'u32[72,128]{1,0:T(1,128)}', space=vmem, size = 0x9000, scoped, tag = 'internal scratch']
  #allocation2 [shape = 'f32[16,32]{1,0:T(8,128)}', space=vmem, size = 0x2000, scoped, tag = 'scratch operand']
  #allocation3 [shape = 's32[1]{0}', space=sflag, size = 0x4, scoped, tag = 'scoped memory for tpu_custom_call.1']
  #allocation4 [shape = 'u8[512]{0}', space=smem, size = 0x200, scoped, tag = 'prefetched SMEM operand 0']
  %s0 = inlined_call_operand.vmem [shape: s32[2], index: 0, kind: input, shape index: {}]
  %s1 = inlined_call_operand.vmem [shape: f32[2,1,64,16], index: 1, kind: input, shape index: {}]
  %s2 = inlined_call_operand.hbm [shape: f32[2,16,8,16], index: 2, kind: input, shape index: {}]
  %s3 = inlined_call_operand.vmem [shape: f32[2,16,128], index: 3, kind: input, shape index: {}]
  %s4 = inlined_call_operand.hbm [shape: f32[2,1,16,8,32], index: 4, kind: output, shape index: {}]
  %s5 = sld [smem:[#allocation0]]
  $region49: #{tpu_custom_call.1} parent=0
    _
  %s7 = ssub.s32 1, %s5
  %s8 = scalar_select 0, %s7, %s5
  %s10 = sshll.u32 %s0, 4
  %s11 = int_to_ptr.vmem [resolvable:$true] %s10
  %13 = dma.vmem_to_smem %s11, 16, [#allocation4], [#allocation3]
  %15 = dma.done [#allocation3], 16
  %16 = sfence
  $region1: #{tpu_custom_call.1} parent=0
    #allocation5 [shape = 'u8[131072]{0}', space=vmem, size = 0x20000, scoped, tag = 'input window, operand 2']
    #allocation6 [shape = 's32[2]{0}', space=sflag, size = 0x8, scoped, tag = 'scoped memory for tpu_custom_call.1']
    #allocation7 [shape = 's32[2]{0}', space=sflag, size = 0x8, scoped, tag = 'scoped memory for tpu_custom_call.1']
    #allocation8 [shape = 'u8[131072]{0}', space=vmem, size = 0x20000, scoped, tag = 'output window, operand 0']
    %17 = vsyncpa [#allocation6], 0
    %s18 = scalar_lea.sflag [#allocation6], 1
    %19 = vsyncpa %s18, 0
    %20 = vsyncpa [#allocation7], 0
    %s21 = scalar_lea.sflag [#allocation7], 1
    %22 = vsyncpa %s21, 0
    loop: start=0, step=1, limit=4
    $region2: #{tpu_custom_call.1} parent=1 // loop_pre_header
      _
    $region3: #{tpu_custom_call.1} parent=1 // loop_header
      %s24 = sphi 0, %s28
      %p25 = scmp.ge.s32.totalorder %s24, 4
      %s31 = sphi 0, %s43
      %s32 = sphi 0, %s39
      %s33 = sphi 0, %s31
      %s34 = sphi 0, %s32
      %s35 = sphi 0, %s33
      %s36 = sphi 0, %s34
      %s50 = sphi 0, %s52
      %s53 = sphi 0, %s50
      %s54 = sphi 0, %s53
      %s70 = sphi 0, %s54
      %s76 = sphi 0, %s78
      %s79 = sphi 0, %s76
      %s80 = sphi 0, %s79
      %s96 = sphi 0, %s80
      %s102 = sphi 0, %s104
      %s105 = sphi 0, %s102
      %s106 = sphi 0, %s105
      %s122 = sphi 0, %s106
      %s130 = sphi 0, %s132
      %s133 = sphi 0, %s130
      %s134 = sphi 0, %s133
      %s150 = sphi 0, %s134
    $region4: #{tpu_custom_call.1} parent=1 // loop_header_branch
      %27 = sbr.rel (%p25) target = $region8
    $region5: #{tpu_custom_call.1} parent=1 // loop_body
      %s29 = ssub.s32 %s24, 1
      %s30 = ssub.s32 %s24, 2
      %s37 = sadd.s32 1, %s32
      %p38 = scmp.ge.s32.totalorder %s37, 2
      %s39 = scalar_select %p38, 0, %s37
      %s40 = sadd.s32 1, %s31
      %s41 = scalar_select %p38, %s40, %s31
      %p42 = scmp.ge.s32.totalorder %s41, 1
      %s43 = scalar_select %p42, 0, %s41
      %s44 = sld [smem:[#allocation4 + %s32]]
      %s45 = sld [smem:[#allocation4 + %s39]]
      %s46 = ssub.s32 %s44, %s45
      %s47 = ssub.s32 %s31, %s43
      %s48 = sor.u32 %s46, %s47
      %p49 = scmp.eq.s32.totalorder %s48, 0
      %s51 = sadd.s32 %s50, 1
      %s52 = scalar_select %p49, %s50, %s51
      %p55 = pneg %p49
      %p56 = scmp.eq.s32.totalorder %s24, 1
      %p57 = por %p55, %p56
      %p58 = scmp.ne.s32.totalorder %s50, %s53
      %p59 = scmp.eq.s32.totalorder %s24, 0
      %p60 = por %p58, %p59
      %p61 = scmp.ne.s32.totalorder %s50, %s53
      %p62 = scmp.eq.s32.totalorder %s29, 1
      %p63 = por %p61, %p62
      %p64 = scmp.ne.s32.totalorder %s53, %s54
      %p65 = scmp.eq.s32.totalorder %s29, 0
      %p66 = por %p64, %p65
      %p67 = scmp.ne.s32.totalorder %s53, %s54
      %p68 = scmp.eq.s32.totalorder %s30, 1
      %p69 = por %p67, %p68
      %p71 = scmp.ne.s32.totalorder %s54, %s70
      %p72 = scmp.eq.s32.totalorder %s30, 0
      %p73 = por %p71, %p72
      %s74 = ssub.s32 %s32, %s39
      %p75 = scmp.eq.s32.totalorder %s74, 0
      %s77 = sadd.s32 %s76, 1
      %s78 = scalar_select %p75, %s76, %s77
      %p81 = pneg %p75
      %p82 = scmp.eq.s32.totalorder %s24, 1
      %p83 = por %p81, %p82
      %p84 = scmp.ne.s32.totalorder %s76, %s79
      %p85 = scmp.eq.s32.totalorder %s24, 0
      %p86 = por %p84, %p85
      %p87 = scmp.ne.s32.totalorder %s76, %s79
      %p88 = scmp.eq.s32.totalorder %s29, 1
      %p89 = por %p87, %p88
      %p90 = scmp.ne.s32.totalorder %s79, %s80
      %p91 = scmp.eq.s32.totalorder %s29, 0
      %p92 = por %p90, %p91
      %p93 = scmp.ne.s32.totalorder %s79, %s80
      %p94 = scmp.eq.s32.totalorder %s30, 1
      %p95 = por %p93, %p94
      %p97 = scmp.ne.s32.totalorder %s80, %s96
      %p98 = scmp.eq.s32.totalorder %s30, 0
      %p99 = por %p97, %p98
      %s100 = ssub.s32 %s32, %s39
      %p101 = scmp.eq.s32.totalorder %s100, 0
      %s103 = sadd.s32 %s102, 1
      %s104 = scalar_select %p101, %s102, %s103
      %p107 = pneg %p101
      %p108 = scmp.eq.s32.totalorder %s24, 1
      %p109 = por %p107, %p108
      %p110 = scmp.ne.s32.totalorder %s102, %s105
      %p111 = scmp.eq.s32.totalorder %s24, 0
      %p112 = por %p110, %p111
      %p113 = scmp.ne.s32.totalorder %s102, %s105
      %p114 = scmp.eq.s32.totalorder %s29, 1
      %p115 = por %p113, %p114
      %p116 = scmp.ne.s32.totalorder %s105, %s106
      %p117 = scmp.eq.s32.totalorder %s29, 0
      %p118 = por %p116, %p117
      %p119 = scmp.ne.s32.totalorder %s105, %s106
      %p120 = scmp.eq.s32.totalorder %s30, 1
      %p121 = por %p119, %p120
      %p123 = scmp.ne.s32.totalorder %s106, %s122
      %p124 = scmp.eq.s32.totalorder %s30, 0
      %p125 = por %p123, %p124
      %s126 = ssub.s32 %s32, %s39
      %s127 = ssub.s32 %s31, %s43
      %s128 = sor.u32 %s126, %s127
      %p129 = scmp.eq.s32.totalorder %s128, 0
      %s131 = sadd.s32 %s130, 1
      %s132 = scalar_select %p129, %s130, %s131
      %p135 = pneg %p129
      %p136 = scmp.eq.s32.totalorder %s24, 1
      %p137 = por %p135, %p136
      %p138 = scmp.ne.s32.totalorder %s130, %s133
      %p139 = scmp.eq.s32.totalorder %s24, 0
      %p140 = por %p138, %p139
      %p141 = scmp.ne.s32.totalorder %s130, %s133
      %p142 = scmp.eq.s32.totalorder %s29, 1
      %p143 = por %p141, %p142
      %p144 = scmp.ne.s32.totalorder %s133, %s134
      %p145 = scmp.eq.s32.totalorder %s29, 0
      %p146 = por %p144, %p145
      %p147 = scmp.ne.s32.totalorder %s133, %s134
      %p148 = scmp.eq.s32.totalorder %s30, 1
      %p149 = por %p147, %p148
      %p151 = scmp.ne.s32.totalorder %s134, %s150
      %p152 = scmp.eq.s32.totalorder %s30, 0
      %p153 = por %p151, %p152
      %p154 = scmp.le.s32.totalorder 1, %s24
      %p155 = scmp.lt.s32.totalorder %s24, 3
      %p156 = pnand %p154, %p155
      %p157 = pneg %p156
      // Predicated region
      $region9: #{tpu_custom_call.1} parent=5 // pred_check
        _
      $region10: #{tpu_custom_call.1} parent=5 // pred_check_branch
        %159 = sbr.rel (%p156) target = $region12
      $region11: #{tpu_custom_call.1} parent=5 // pred_region
        %s160 = ssub.s32 %s24, 1
      $region12: #{tpu_custom_call.1} parent=5 // pred_fallthru
        _
      %p161 = scmp.lt.s32.totalorder %s24, 2
      // Predicated region
      $region13: #{tpu_custom_call.1} parent=5 // pred_check
        %p162 = pneg %p161
      $region14: #{tpu_custom_call.1} parent=5 // pred_check_branch
        %164 = sbr.rel (%p162) target = $region16
      $region15: #{tpu_custom_call.1} parent=5 // pred_region
        // Predicated region
        $region17: #{tpu_custom_call.1} parent=15 // pred_check
          %p165 = pneg %p60
        $region18: #{tpu_custom_call.1} parent=15 // pred_check_branch
          %167 = sbr.rel (%p165) target = $region20
        $region19: #{tpu_custom_call.1} parent=15 // pred_region
          %s168 = sld [smem:[#allocation4 + %s32]]
          %p169 = scmp.lt.s32.totalorder %s168, 1
          %s170 = scalar_select %p169, %s168, 1
          %p171 = scmp.lt.s32.totalorder %s31, 0
          %s172 = scalar_select %p171, %s31, 0
          %s173 = smul.addr %s172, 8
          %s174 = smul.addr %s170, 8
          %s175 = sadd.s32 %s173, %s174
          %s176 = smul.addr %s175, 8
          %s177 = scalar_lea.vmem %s1, %s176
          %s178 = sld [smem:[#allocation4 + %s32]]
        $region20: #{tpu_custom_call.1} parent=15 // pred_fallthru
          _
        // Predicated region
        $region21: #{tpu_custom_call.1} parent=15 // pred_check
          %p179 = pneg %p86
        $region22: #{tpu_custom_call.1} parent=15 // pred_check_branch
          %181 = sbr.rel (%p179) target = $region24
        $region23: #{tpu_custom_call.1} parent=15 // pred_region
          %s182 = sand.u32 %s76, 1
          %s183 = scalar_lea.sflag [#allocation6], %s182
          %s184 = sand.u32 %s76, 1
          %s185 = smul.addr %s184, 128
          %s186 = scalar_lea.vmem [#allocation5], %s185
          %188 = vsyncadd %s183, 0
          %s189 = smul.addr %s32, 16
          %s190 = smul.addr %s189, 8
          %s191 = scalar_lea.hbm %s2, %s190
          %s192 = sshll.u32 %s191, 4
          %s193 = int_to_ptr.hbm [resolvable:$true] %s192
          %s194 = sshll.u32 %s186, 4
          %s195 = int_to_ptr.vmem [resolvable:$true] %s194
          %200 = dma.hbm_to_vmem [thread:$0]  %s193, 2048, %s195, %s183, 128, 128, 8
        $region24: #{tpu_custom_call.1} parent=15 // pred_fallthru
          _
        // Predicated region
        $region25: #{tpu_custom_call.1} parent=15 // pred_check
          %p201 = pneg %p112
        $region26: #{tpu_custom_call.1} parent=15 // pred_check_branch
          %203 = sbr.rel (%p201) target = $region28
        $region27: #{tpu_custom_call.1} parent=15 // pred_region
          %p204 = scmp.lt.s32.totalorder %s32, 1
          %s205 = scalar_select %p204, %s32, 1
          %s206 = smul.addr %s205, 2
          %s207 = smul.addr %s206, 8
          %s208 = scalar_lea.vmem %s3, %s207
        $region28: #{tpu_custom_call.1} parent=15 // pred_fallthru
          _
      $region16: #{tpu_custom_call.1} parent=5 // pred_fallthru
        _
      %p209 = scmp.le.s32.totalorder 1, %s24
      %p210 = scmp.lt.s32.totalorder %s24, 3
      %p211 = pnand %p209, %p210
      %p212 = pneg %p211
      // Predicated region
      $region29: #{tpu_custom_call.1} parent=5 // pred_check
        _
      $region30: #{tpu_custom_call.1} parent=5 // pred_check_branch
        %214 = sbr.rel (%p211) target = $region32
      $region31: #{tpu_custom_call.1} parent=5 // pred_region
        %s215 = ssub.s32 %s24, 1
        %s216 = sand.u32 %s79, 1
        %s217 = scalar_lea.sflag [#allocation6], %s216
        %s218 = sand.u32 %s79, 1
        %s219 = smul.addr %s218, 128
        %s220 = scalar_lea.vmem [#allocation5], %s219
        // Predicated region
        $region33: #{tpu_custom_call.1} parent=31 // pred_check
          %p221 = pneg %p92
        $region34: #{tpu_custom_call.1} parent=31 // pred_check_branch
          %223 = sbr.rel (%p221) target = $region36
        $region35: #{tpu_custom_call.1} parent=31 // pred_region
          %225 = dma.done %s217, 2048
        $region36: #{tpu_custom_call.1} parent=31 // pred_fallthru
          _
        %s226 = sld [smem:[#allocation4 + %s34]]
        %p227 = scmp.lt.s32.totalorder %s226, 1
        %s228 = scalar_select %p227, %s226, 1
        %p229 = scmp.lt.s32.totalorder %s33, 0
        %s230 = scalar_select %p229, %s33, 0
        %s231 = smul.addr %s230, 8
        %s232 = smul.addr %s228, 8
        %s233 = sadd.s32 %s231, %s232
        %s234 = smul.addr %s233, 8
        %s235 = scalar_lea.vmem %s1, %s234
        %p236 = pneg %p66
        %p237 = pneg %p63
        %s238 = sand.u32 %s79, 1
        %s239 = scalar_lea.sflag [#allocation6], %s238
        %s240 = sand.u32 %s79, 1
        %s241 = smul.addr %s240, 128
        %s242 = scalar_lea.vmem [#allocation5], %s241
        %p243 = pneg %p92
        %p244 = pneg %p89
        %p245 = scmp.lt.s32.totalorder %s34, 1
        %s246 = scalar_select %p245, %s34, 1
        %s247 = smul.addr %s246, 2
        %s248 = smul.addr %s247, 8
        %s249 = scalar_lea.vmem %s3, %s248
        %p250 = pneg %p118
        %p251 = pneg %p115
        %p252 = pneg %p146
        %p253 = pneg %p143
        %s254 = sand.u32 %s133, 1
        %s255 = scalar_lea.sflag [#allocation7], %s254
        %s256 = sand.u32 %s133, 1
        %s257 = smul.addr %s256, 128
        %s258 = scalar_lea.vmem [#allocation8], %s257
        %s259 = sld [smem:[#allocation4 + %s34]]
        %p260 = scmp.lt.s32.totalorder %s259, 1
        %s261 = scalar_select %p260, %s259, 1
        %p262 = scmp.lt.s32.totalorder %s33, 0
        %s263 = scalar_select %p262, %s33, 0
        %s264 = smul.addr %s263, 8
        %s265 = smul.addr %s261, 8
        %s266 = sadd.s32 %s264, %s265
        %s267 = smul.addr %s266, 8
        %s268 = scalar_lea.vmem %s1, %s267
        %s269 = sld [smem:[#allocation4 + %s34]]
        %p270 = scmp.lt.s32.totalorder %s34, 1
        %s271 = scalar_select %p270, %s34, 1
        %s272 = smul.addr %s271, 2
        %s273 = smul.addr %s272, 8
        %s274 = scalar_lea.vmem %s3, %s273
        %v275 = vld [vmem:[%s268] sm:$0xff]
        %v276 = vld [vmem:[%s268 + $0x8] sm:$0xff]
        %v277 = vld [vmem:[%s268 + $0x10] sm:$0xff]
        %v278 = vld [vmem:[%s268 + $0x18] sm:$0xff]
        %v279 = vld [vmem:[%s268 + $0x20] sm:$0xff]
        %v280 = vld [vmem:[%s268 + $0x28] sm:$0xff]
        %v281 = vld [vmem:[%s268 + $0x30] sm:$0xff]
        %v282 = vld [vmem:[%s268 + $0x38] sm:$0xff]
        %v283 = vld [vmem:[%s274] sm:$0xff]
        %v284 = vld [vmem:[%s274 + $0x8] sm:$0xff]
        %vm285 = vcmask 130048
        %v287 = vsel %vm285, %v275, 0
        %v290 = vsel %vm285, %v276, 0
        %v293 = vsel %vm285, %v277, 0
        %v296 = vsel %vm285, %v278, 0
        %v299 = vsel %vm285, %v279, 0
        %v302 = vsel %vm285, %v280, 0
        %v305 = vsel %vm285, %v281, 0
        %v308 = vsel %vm285, %v282, 0
        %310 = vmatpush.msra.mxu0 0.0
        %311 = vmatpush.msra.mxu0 0.0
        %312 = vmatpush.msra.mxu0 0.0
        %313 = vmatpush.msra.mxu0 0.0
        %314 = vmatpush.msra.mxu0 0.0
        %315 = vmatpush.msra.mxu0 0.0
        %316 = vmatpush.msra.mxu0 0.0
        %317 = vmatpush.msra.mxu0 0.0
        %318 = vmatpush.msra.mxu0 0.0
        %319 = vmatpush.msra.mxu0 0.0
        %320 = vmatpush.msra.mxu0 0.0
        %321 = vmatpush.msra.mxu0 0.0
        %322 = vmatpush.msra.mxu0 0.0
        %323 = vmatpush.msra.mxu0 0.0
        %324 = vmatpush.msra.mxu0 %v284
        %325 = vmatpush.msra.mxu0 %v283
        %326 = vmatmul.f32.gmra.mxu0 %v287
        %v327 = vpop.f32.mrf.mxu0
        %v328 = vadd.f32 0.0, %v327
        %329 = vmatmul.f32.gmra.mxu0 %v290
        %v330 = vpop.f32.mrf.mxu0
        %v331 = vadd.f32 0.0, %v330
        %332 = vmatmul.f32.gmra.mxu0 %v293
        %v333 = vpop.f32.mrf.mxu0
        %v334 = vadd.f32 0.0, %v333
        %335 = vmatmul.f32.gmra.mxu0 %v296
        %v336 = vpop.f32.mrf.mxu0
        %v337 = vadd.f32 0.0, %v336
        %338 = vmatmul.f32.gmra.mxu0 %v299
        %v339 = vpop.f32.mrf.mxu0
        %v340 = vadd.f32 0.0, %v339
        %341 = vmatmul.f32.gmra.mxu0 %v302
        %v342 = vpop.f32.mrf.mxu0
        %v343 = vadd.f32 0.0, %v342
        %344 = vmatmul.f32.gmra.mxu0 %v305
        %v345 = vpop.f32.mrf.mxu0
        %v346 = vadd.f32 0.0, %v345
        %347 = vmatmul.f32.gmra.mxu0 %v308
        %v348 = vpop.f32.mrf.mxu0
        %v349 = vadd.f32 0.0, %v348
        %350 = vdwg.mxu0
        %v351 = vld [vmem:[%s220] sm:$0xff]
        %vm352 = vcmask 64512
        %353 = vst.msk [vmem:[#allocation2] sm:$0xff] %vm352, %v328
        %354 = vst.msk [vmem:[#allocation2 + $0x8] sm:$0xff] %vm352, %v331
        %357 = vrot.lane.b32.xlu0 %v334, 8
        %v358 = vpop.permute.xlu0 %357
        %359 = vrot.lane.b32.xlu0 %v337, 8
        %v360 = vpop.permute.xlu0 %359
        %vm363 = vcmask 130112
        %364 = vst.msk [vmem:[#allocation2] sm:$0xff] %vm363, %v358
        %365 = vst.msk [vmem:[#allocation2 + $0x8] sm:$0xff] %vm363, %v360
        %368 = vrot.lane.b32.xlu0 %v340, 16
        %v369 = vpop.permute.xlu0 %368
        %370 = vrot.lane.b32.xlu0 %v343, 16
        %v371 = vpop.permute.xlu0 %370
        %vm374 = vcmask 195712
        %375 = vst.msk [vmem:[#allocation2] sm:$0xff] %vm374, %v369
        %376 = vst.msk [vmem:[#allocation2 + $0x8] sm:$0xff] %vm374, %v371
        %379 = vrot.lane.b32.xlu0 %v346, 24
        %v380 = vpop.permute.xlu0 %379
        %381 = vrot.lane.b32.xlu0 %v349, 24
        %v382 = vpop.permute.xlu0 %381
        %vm385 = vcmask 261312
        %386 = vst.msk [vmem:[#allocation2] sm:$0xff] %vm385, %v380
        %387 = vst.msk [vmem:[#allocation2 + $0x8] sm:$0xff] %vm385, %v382
        %v388 = vld [vmem:[#allocation2] sm:$0xff]
        %v389 = vld [vmem:[#allocation2 + $0x8] sm:$0xff]
        %v391 = vsel %vm285, %v351, 0
        %393 = vmatpush.msra.mxu0 0.0
        %394 = vmatpush.msra.mxu0 0.0
        %395 = vmatpush.msra.mxu0 0.0
        %396 = vmatpush.msra.mxu0 0.0
        %397 = vmatpush.msra.mxu0 0.0
        %398 = vmatpush.msra.mxu0 0.0
        %399 = vmatpush.msra.mxu0 0.0
        %400 = vmatpush.msra.mxu0 0.0
        %401 = vmatpush.msra.mxu0 0.0
        %402 = vmatpush.msra.mxu0 0.0
        %403 = vmatpush.msra.mxu0 0.0
        %404 = vmatpush.msra.mxu0 0.0
        %405 = vmatpush.msra.mxu0 0.0
        %406 = vmatpush.msra.mxu0 0.0
        %407 = vmatpush.msra.mxu0 %v389
        %408 = vmatpush.msra.mxu0 %v388
        %409 = vmatmul.f32.gmra.mxu0 %v391
        %v410 = vpop.f32.mrf.mxu0
        %v411 = vadd.f32 0.0, %v410
        %412 = vdwg.mxu0
        %vm413 = vcmask 261120
        %414 = vst.msk [vmem:[%s258] sm:$0xff] %vm413, %v411
        %s415 = scalar_lea.vmem %s220, 8 [#allocation5]
        %v416 = vld [vmem:[%s415] sm:$0xff]
        %419 = vrot.lane.b32.xlu0 %v328, 120
        %v420 = vpop.permute.xlu0 %419
        %421 = vrot.lane.b32.xlu0 %v331, 120
        %v422 = vpop.permute.xlu0 %421
        %425 = vst.msk [vmem:[#allocation2] sm:$0xff] %vm352, %v420
        %426 = vst.msk [vmem:[#allocation2 + $0x8] sm:$0xff] %vm352, %v422
        %427 = vst.msk [vmem:[#allocation2] sm:$0xff] %vm363, %v334
        %428 = vst.msk [vmem:[#allocation2 + $0x8] sm:$0xff] %vm363, %v337
        %429 = vrot.lane.b32.xlu0 %v340, 8
        %v430 = vpop.permute.xlu0 %429
        %431 = vrot.lane.b32.xlu0 %v343, 8
        %v432 = vpop.permute.xlu0 %431
        %435 = vst.msk [vmem:[#allocation2] sm:$0xff] %vm374, %v430
        %436 = vst.msk [vmem:[#allocation2 + $0x8] sm:$0xff] %vm374, %v432
        %437 = vrot.lane.b32.xlu0 %v346, 16
        %v438 = vpop.permute.xlu0 %437
        %439 = vrot.lane.b32.xlu0 %v349, 16
        %v440 = vpop.permute.xlu0 %439
        %443 = vst.msk [vmem:[#allocation2] sm:$0xff] %vm385, %v438
        %444 = vst.msk [vmem:[#allocation2 + $0x8] sm:$0xff] %vm385, %v440
        %v445 = vld [vmem:[#allocation2] sm:$0xff]
        %v446 = vld [vmem:[#allocation2 + $0x8] sm:$0xff]
        %v448 = vsel %vm285, %v416, 0
        %450 = vmatpush.msra.mxu0 0.0
        %451 = vmatpush.msra.mxu0 0.0
        %452 = vmatpush.msra.mxu0 0.0
        %453 = vmatpush.msra.mxu0 0.0
        %454 = vmatpush.msra.mxu0 0.0
        %455 = vmatpush.msra.mxu0 0.0
        %456 = vmatpush.msra.mxu0 0.0
        %457 = vmatpush.msra.mxu0 0.0
        %458 = vmatpush.msra.mxu0 0.0
        %459 = vmatpush.msra.mxu0 0.0
        %460 = vmatpush.msra.mxu0 0.0
        %461 = vmatpush.msra.mxu0 0.0
        %462 = vmatpush.msra.mxu0 0.0
        %463 = vmatpush.msra.mxu0 0.0
        %464 = vmatpush.msra.mxu0 %v446
        %465 = vmatpush.msra.mxu0 %v445
        %466 = vmatmul.f32.gmra.mxu0 %v448
        %v467 = vpop.f32.mrf.mxu0
        %v468 = vadd.f32 0.0, %v467
        %469 = vdwg.mxu0
        %s470 = scalar_lea.vmem %s258, 8 [#allocation8]
        %471 = vst.msk [vmem:[%s470] sm:$0xff] %vm413, %v468
        %s472 = scalar_lea.vmem %s220, 16 [#allocation5]
        %v473 = vld [vmem:[%s472] sm:$0xff]
        %474 = vrot.lane.b32.xlu0 %v328, 112
        %v475 = vpop.permute.xlu0 %474
        %476 = vrot.lane.b32.xlu0 %v331, 112
        %v477 = vpop.permute.xlu0 %476
        %480 = vst.msk [vmem:[#allocation2] sm:$0xff] %vm352, %v475
        %481 = vst.msk [vmem:[#allocation2 + $0x8] sm:$0xff] %vm352, %v477
        %482 = vrot.lane.b32.xlu0 %v334, 120
        %v483 = vpop.permute.xlu0 %482
        %484 = vrot.lane.b32.xlu0 %v337, 120
        %v485 = vpop.permute.xlu0 %484
        %488 = vst.msk [vmem:[#allocation2] sm:$0xff] %vm363, %v483
        %489 = vst.msk [vmem:[#allocation2 + $0x8] sm:$0xff] %vm363, %v485
        %490 = vst.msk [vmem:[#allocation2] sm:$0xff] %vm374, %v340
        %491 = vst.msk [vmem:[#allocation2 + $0x8] sm:$0xff] %vm374, %v343
        %492 = vrot.lane.b32.xlu0 %v346, 8
        %v493 = vpop.permute.xlu0 %492
        %494 = vrot.lane.b32.xlu0 %v349, 8
        %v495 = vpop.permute.xlu0 %494
        %498 = vst.msk [vmem:[#allocation2] sm:$0xff] %vm385, %v493
        %499 = vst.msk [vmem:[#allocation2 + $0x8] sm:$0xff] %vm385, %v495
        %v500 = vld [vmem:[#allocation2] sm:$0xff]
        %v501 = vld [vmem:[#allocation2 + $0x8] sm:$0xff]
        %v503 = vsel %vm285, %v473, 0
        %505 = vmatpush.msra.mxu0 0.0
        %506 = vmatpush.msra.mxu0 0.0
        %507 = vmatpush.msra.mxu0 0.0
        %508 = vmatpush.msra.mxu0 0.0
        %509 = vmatpush.msra.mxu0 0.0
        %510 = vmatpush.msra.mxu0 0.0
        %511 = vmatpush.msra.mxu0 0.0
        %512 = vmatpush.msra.mxu0 0.0
        %513 = vmatpush.msra.mxu0 0.0
        %514 = vmatpush.msra.mxu0 0.0
        %515 = vmatpush.msra.mxu0 0.0
        %516 = vmatpush.msra.mxu0 0.0
        %517 = vmatpush.msra.mxu0 0.0
        %518 = vmatpush.msra.mxu0 0.0
        %519 = vmatpush.msra.mxu0 %v501
        %520 = vmatpush.msra.mxu0 %v500
        %521 = vmatmul.f32.gmra.mxu0 %v503
        %v522 = vpop.f32.mrf.mxu0
        %v523 = vadd.f32 0.0, %v522
        %524 = vdwg.mxu0
        %s525 = scalar_lea.vmem %s258, 16 [#allocation8]
        %526 = vst.msk [vmem:[%s525] sm:$0xff] %vm413, %v523
        %s527 = scalar_lea.vmem %s220, 24 [#allocation5]
        %v528 = vld [vmem:[%s527] sm:$0xff]
        %529 = vrot.lane.b32.xlu0 %v328, 104
        %v530 = vpop.permute.xlu0 %529
        %531 = vrot.lane.b32.xlu0 %v331, 104
        %v532 = vpop.permute.xlu0 %531
        %535 = vst.msk [vmem:[#allocation2] sm:$0xff] %vm352, %v530
        %536 = vst.msk [vmem:[#allocation2 + $0x8] sm:$0xff] %vm352, %v532
        %537 = vrot.lane.b32.xlu0 %v334, 112
        %v538 = vpop.permute.xlu0 %537
        %539 = vrot.lane.b32.xlu0 %v337, 112
        %v540 = vpop.permute.xlu0 %539
        %543 = vst.msk [vmem:[#allocation2] sm:$0xff] %vm363, %v538
        %544 = vst.msk [vmem:[#allocation2 + $0x8] sm:$0xff] %vm363, %v540
        %545 = vrot.lane.b32.xlu0 %v340, 120
        %v546 = vpop.permute.xlu0 %545
        %547 = vrot.lane.b32.xlu0 %v343, 120
        %v548 = vpop.permute.xlu0 %547
        %551 = vst.msk [vmem:[#allocation2] sm:$0xff] %vm374, %v546
        %552 = vst.msk [vmem:[#allocation2 + $0x8] sm:$0xff] %vm374, %v548
        %553 = vst.msk [vmem:[#allocation2] sm:$0xff] %vm385, %v346
        %554 = vst.msk [vmem:[#allocation2 + $0x8] sm:$0xff] %vm385, %v349
        %v555 = vld [vmem:[#allocation2] sm:$0xff]
        %v556 = vld [vmem:[#allocation2 + $0x8] sm:$0xff]
        %v558 = vsel %vm285, %v528, 0
        %560 = vmatpush.msra.mxu0 0.0
        %561 = vmatpush.msra.mxu0 0.0
        %562 = vmatpush.msra.mxu0 0.0
        %563 = vmatpush.msra.mxu0 0.0
        %564 = vmatpush.msra.mxu0 0.0
        %565 = vmatpush.msra.mxu0 0.0
        %566 = vmatpush.msra.mxu0 0.0
        %567 = vmatpush.msra.mxu0 0.0
        %568 = vmatpush.msra.mxu0 0.0
        %569 = vmatpush.msra.mxu0 0.0
        %570 = vmatpush.msra.mxu0 0.0
        %571 = vmatpush.msra.mxu0 0.0
        %572 = vmatpush.msra.mxu0 0.0
        %573 = vmatpush.msra.mxu0 0.0
        %574 = vmatpush.msra.mxu0 %v556
        %575 = vmatpush.msra.mxu0 %v555
        %576 = vmatmul.f32.gmra.mxu0 %v558
        %v577 = vpop.f32.mrf.mxu0
        %v578 = vadd.f32 0.0, %v577
        %579 = vdwg.mxu0
        %s580 = scalar_lea.vmem %s258, 24 [#allocation8]
        %581 = vst.msk [vmem:[%s580] sm:$0xff] %vm413, %v578
        %s582 = scalar_lea.vmem %s220, 32 [#allocation5]
        %v583 = vld [vmem:[%s582] sm:$0xff]
        %584 = vrot.lane.b32.xlu0 %v328, 96
        %v585 = vpop.permute.xlu0 %584
        %586 = vrot.lane.b32.xlu0 %v331, 96
        %v587 = vpop.permute.xlu0 %586
        %590 = vst.msk [vmem:[#allocation2] sm:$0xff] %vm352, %v585
        %591 = vst.msk [vmem:[#allocation2 + $0x8] sm:$0xff] %vm352, %v587
        %592 = vrot.lane.b32.xlu0 %v334, 104
        %v593 = vpop.permute.xlu0 %592
        %594 = vrot.lane.b32.xlu0 %v337, 104
        %v595 = vpop.permute.xlu0 %594
        %598 = vst.msk [vmem:[#allocation2] sm:$0xff] %vm363, %v593
        %599 = vst.msk [vmem:[#allocation2 + $0x8] sm:$0xff] %vm363, %v595
        %600 = vrot.lane.b32.xlu0 %v340, 112
        %v601 = vpop.permute.xlu0 %600
        %602 = vrot.lane.b32.xlu0 %v343, 112
        %v603 = vpop.permute.xlu0 %602
        %606 = vst.msk [vmem:[#allocation2] sm:$0xff] %vm374, %v601
        %607 = vst.msk [vmem:[#allocation2 + $0x8] sm:$0xff] %vm374, %v603
        %608 = vrot.lane.b32.xlu0 %v346, 120
        %v609 = vpop.permute.xlu0 %608
        %610 = vrot.lane.b32.xlu0 %v349, 120
        %v611 = vpop.permute.xlu0 %610
        %614 = vst.msk [vmem:[#allocation2] sm:$0xff] %vm385, %v609
        %615 = vst.msk [vmem:[#allocation2 + $0x8] sm:$0xff] %vm385, %v611
        %v616 = vld [vmem:[#allocation2] sm:$0xff]
        %v617 = vld [vmem:[#allocation2 + $0x8] sm:$0xff]
        %v619 = vsel %vm285, %v583, 0
        %621 = vmatpush.msra.mxu0 0.0
        %622 = vmatpush.msra.mxu0 0.0
        %623 = vmatpush.msra.mxu0 0.0
        %624 = vmatpush.msra.mxu0 0.0
        %625 = vmatpush.msra.mxu0 0.0
        %626 = vmatpush.msra.mxu0 0.0
        %627 = vmatpush.msra.mxu0 0.0
        %628 = vmatpush.msra.mxu0 0.0
        %629 = vmatpush.msra.mxu0 0.0
        %630 = vmatpush.msra.mxu0 0.0
        %631 = vmatpush.msra.mxu0 0.0
        %632 = vmatpush.msra.mxu0 0.0
        %633 = vmatpush.msra.mxu0 0.0
        %634 = vmatpush.msra.mxu0 0.0
        %635 = vmatpush.msra.mxu0 %v617
        %636 = vmatpush.msra.mxu0 %v616
        %637 = vmatmul.f32.gmra.mxu0 %v619
        %v638 = vpop.f32.mrf.mxu0
        %v639 = vadd.f32 0.0, %v638
        %640 = vdwg.mxu0
        %s641 = scalar_lea.vmem %s258, 32 [#allocation8]
        %642 = vst.msk [vmem:[%s641] sm:$0xff] %vm413, %v639
        %s643 = scalar_lea.vmem %s220, 40 [#allocation5]
        %v644 = vld [vmem:[%s643] sm:$0xff]
        %645 = vrot.lane.b32.xlu0 %v328, 88
        %v646 = vpop.permute.xlu0 %645
        %647 = vrot.lane.b32.xlu0 %v331, 88
        %v648 = vpop.permute.xlu0 %647
        %651 = vst.msk [vmem:[#allocation2] sm:$0xff] %vm352, %v646
        %652 = vst.msk [vmem:[#allocation2 + $0x8] sm:$0xff] %vm352, %v648
        %653 = vrot.lane.b32.xlu0 %v334, 96
        %v654 = vpop.permute.xlu0 %653
        %655 = vrot.lane.b32.xlu0 %v337, 96
        %v656 = vpop.permute.xlu0 %655
        %659 = vst.msk [vmem:[#allocation2] sm:$0xff] %vm363, %v654
        %660 = vst.msk [vmem:[#allocation2 + $0x8] sm:$0xff] %vm363, %v656
        %661 = vrot.lane.b32.xlu0 %v340, 104
        %v662 = vpop.permute.xlu0 %661
        %663 = vrot.lane.b32.xlu0 %v343, 104
        %v664 = vpop.permute.xlu0 %663
        %667 = vst.msk [vmem:[#allocation2] sm:$0xff] %vm374, %v662
        %668 = vst.msk [vmem:[#allocation2 + $0x8] sm:$0xff] %vm374, %v664
        %669 = vrot.lane.b32.xlu0 %v346, 112
        %v670 = vpop.permute.xlu0 %669
        %671 = vrot.lane.b32.xlu0 %v349, 112
        %v672 = vpop.permute.xlu0 %671
        %675 = vst.msk [vmem:[#allocation2] sm:$0xff] %vm385, %v670
        %676 = vst.msk [vmem:[#allocation2 + $0x8] sm:$0xff] %vm385, %v672
        %v677 = vld [vmem:[#allocation2] sm:$0xff]
        %v678 = vld [vmem:[#allocation2 + $0x8] sm:$0xff]
        %v680 = vsel %vm285, %v644, 0
        %682 = vmatpush.msra.mxu0 0.0
        %683 = vmatpush.msra.mxu0 0.0
        %684 = vmatpush.msra.mxu0 0.0
        %685 = vmatpush.msra.mxu0 0.0
        %686 = vmatpush.msra.mxu0 0.0
        %687 = vmatpush.msra.mxu0 0.0
        %688 = vmatpush.msra.mxu0 0.0
        %689 = vmatpush.msra.mxu0 0.0
        %690 = vmatpush.msra.mxu0 0.0
        %691 = vmatpush.msra.mxu0 0.0
        %692 = vmatpush.msra.mxu0 0.0
        %693 = vmatpush.msra.mxu0 0.0
        %694 = vmatpush.msra.mxu0 0.0
        %695 = vmatpush.msra.mxu0 0.0
        %696 = vmatpush.msra.mxu0 %v678
        %697 = vmatpush.msra.mxu0 %v677
        %698 = vmatmul.f32.gmra.mxu0 %v680
        %v699 = vpop.f32.mrf.mxu0
        %v700 = vadd.f32 0.0, %v699
        %701 = vdwg.mxu0
        %s702 = scalar_lea.vmem %s258, 40 [#allocation8]
        %703 = vst.msk [vmem:[%s702] sm:$0xff] %vm413, %v700
        %s704 = scalar_lea.vmem %s220, 48 [#allocation5]
        %v705 = vld [vmem:[%s704] sm:$0xff]
        %706 = vrot.lane.b32.xlu0 %v328, 80
        %v707 = vpop.permute.xlu0 %706
        %708 = vrot.lane.b32.xlu0 %v331, 80
        %v709 = vpop.permute.xlu0 %708
        %712 = vst.msk [vmem:[#allocation2] sm:$0xff] %vm352, %v707
        %713 = vst.msk [vmem:[#allocation2 + $0x8] sm:$0xff] %vm352, %v709
        %714 = vrot.lane.b32.xlu0 %v334, 88
        %v715 = vpop.permute.xlu0 %714
        %716 = vrot.lane.b32.xlu0 %v337, 88
        %v717 = vpop.permute.xlu0 %716
        %720 = vst.msk [vmem:[#allocation2] sm:$0xff] %vm363, %v715
        %721 = vst.msk [vmem:[#allocation2 + $0x8] sm:$0xff] %vm363, %v717
        %722 = vrot.lane.b32.xlu0 %v340, 96
        %v723 = vpop.permute.xlu0 %722
        %724 = vrot.lane.b32.xlu0 %v343, 96
        %v725 = vpop.permute.xlu0 %724
        %728 = vst.msk [vmem:[#allocation2] sm:$0xff] %vm374, %v723
        %729 = vst.msk [vmem:[#allocation2 + $0x8] sm:$0xff] %vm374, %v725
        %730 = vrot.lane.b32.xlu0 %v346, 104
        %v731 = vpop.permute.xlu0 %730
        %732 = vrot.lane.b32.xlu0 %v349, 104
        %v733 = vpop.permute.xlu0 %732
        %736 = vst.msk [vmem:[#allocation2] sm:$0xff] %vm385, %v731
        %737 = vst.msk [vmem:[#allocation2 + $0x8] sm:$0xff] %vm385, %v733
        %v738 = vld [vmem:[#allocation2] sm:$0xff]
        %v739 = vld [vmem:[#allocation2 + $0x8] sm:$0xff]
        %v741 = vsel %vm285, %v705, 0
        %743 = vmatpush.msra.mxu0 0.0
        %744 = vmatpush.msra.mxu0 0.0
        %745 = vmatpush.msra.mxu0 0.0
        %746 = vmatpush.msra.mxu0 0.0
        %747 = vmatpush.msra.mxu0 0.0
        %748 = vmatpush.msra.mxu0 0.0
        %749 = vmatpush.msra.mxu0 0.0
        %750 = vmatpush.msra.mxu0 0.0
        %751 = vmatpush.msra.mxu0 0.0
        %752 = vmatpush.msra.mxu0 0.0
        %753 = vmatpush.msra.mxu0 0.0
        %754 = vmatpush.msra.mxu0 0.0
        %755 = vmatpush.msra.mxu0 0.0
        %756 = vmatpush.msra.mxu0 0.0
        %757 = vmatpush.msra.mxu0 %v739
        %758 = vmatpush.msra.mxu0 %v738
        %759 = vmatmul.f32.gmra.mxu0 %v741
        %v760 = vpop.f32.mrf.mxu0
        %v761 = vadd.f32 0.0, %v760
        %762 = vdwg.mxu0
        %s763 = scalar_lea.vmem %s258, 48 [#allocation8]
        %764 = vst.msk [vmem:[%s763] sm:$0xff] %vm413, %v761
        %s765 = scalar_lea.vmem %s220, 56 [#allocation5]
        %v766 = vld [vmem:[%s765] sm:$0xff]
        %767 = vrot.lane.b32.xlu0 %v328, 72
        %v768 = vpop.permute.xlu0 %767
        %769 = vrot.lane.b32.xlu0 %v331, 72
        %v770 = vpop.permute.xlu0 %769
        %773 = vst.msk [vmem:[#allocation2] sm:$0xff] %vm352, %v768
        %774 = vst.msk [vmem:[#allocation2 + $0x8] sm:$0xff] %vm352, %v770
        %775 = vrot.lane.b32.xlu0 %v334, 80
        %v776 = vpop.permute.xlu0 %775
        %777 = vrot.lane.b32.xlu0 %v337, 80
        %v778 = vpop.permute.xlu0 %777
        %781 = vst.msk [vmem:[#allocation2] sm:$0xff] %vm363, %v776
        %782 = vst.msk [vmem:[#allocation2 + $0x8] sm:$0xff] %vm363, %v778
        %783 = vrot.lane.b32.xlu0 %v340, 88
        %v784 = vpop.permute.xlu0 %783
        %785 = vrot.lane.b32.xlu0 %v343, 88
        %v786 = vpop.permute.xlu0 %785
        %789 = vst.msk [vmem:[#allocation2] sm:$0xff] %vm374, %v784
        %790 = vst.msk [vmem:[#allocation2 + $0x8] sm:$0xff] %vm374, %v786
        %791 = vrot.lane.b32.xlu0 %v346, 96
        %v792 = vpop.permute.xlu0 %791
        %793 = vrot.lane.b32.xlu0 %v349, 96
        %v794 = vpop.permute.xlu0 %793
        %797 = vst.msk [vmem:[#allocation2] sm:$0xff] %vm385, %v792
        %798 = vst.msk [vmem:[#allocation2 + $0x8] sm:$0xff] %vm385, %v794
        %v799 = vld [vmem:[#allocation2] sm:$0xff]
        %v800 = vld [vmem:[#allocation2 + $0x8] sm:$0xff]
        %v802 = vsel %vm285, %v766, 0
        %804 = vmatpush.msra.mxu0 0.0
        %805 = vmatpush.msra.mxu0 0.0
        %806 = vmatpush.msra.mxu0 0.0
        %807 = vmatpush.msra.mxu0 0.0
        %808 = vmatpush.msra.mxu0 0.0
        %809 = vmatpush.msra.mxu0 0.0
        %810 = vmatpush.msra.mxu0 0.0
        %811 = vmatpush.msra.mxu0 0.0
        %812 = vmatpush.msra.mxu0 0.0
        %813 = vmatpush.msra.mxu0 0.0
        %814 = vmatpush.msra.mxu0 0.0
        %815 = vmatpush.msra.mxu0 0.0
        %816 = vmatpush.msra.mxu0 0.0
        %817 = vmatpush.msra.mxu0 0.0
        %818 = vmatpush.msra.mxu0 %v800
        %819 = vmatpush.msra.mxu0 %v799
        %820 = vmatmul.f32.gmra.mxu0 %v802
        %v821 = vpop.f32.mrf.mxu0
        %v822 = vadd.f32 0.0, %v821
        %823 = vdwg.mxu0
        %s824 = scalar_lea.vmem %s258, 56 [#allocation8]
        %825 = vst.msk [vmem:[%s824] sm:$0xff] %vm413, %v822
        %s826 = scalar_lea.vmem %s220, 64 [#allocation5]
        %v827 = vld [vmem:[%s826] sm:$0xff]
        %828 = vrot.lane.b32.xlu0 %v328, 64
        %v829 = vpop.permute.xlu0 %828
        %830 = vrot.lane.b32.xlu0 %v331, 64
        %v831 = vpop.permute.xlu0 %830
        %834 = vst.msk [vmem:[#allocation2] sm:$0xff] %vm352, %v829
        %835 = vst.msk [vmem:[#allocation2 + $0x8] sm:$0xff] %vm352, %v831
        %836 = vrot.lane.b32.xlu0 %v334, 72
        %v837 = vpop.permute.xlu0 %836
        %838 = vrot.lane.b32.xlu0 %v337, 72
        %v839 = vpop.permute.xlu0 %838
        %842 = vst.msk [vmem:[#allocation2] sm:$0xff] %vm363, %v837
        %843 = vst.msk [vmem:[#allocation2 + $0x8] sm:$0xff] %vm363, %v839
        %844 = vrot.lane.b32.xlu0 %v340, 80
        %v845 = vpop.permute.xlu0 %844
        %846 = vrot.lane.b32.xlu0 %v343, 80
        %v847 = vpop.permute.xlu0 %846
        %850 = vst.msk [vmem:[#allocation2] sm:$0xff] %vm374, %v845
        %851 = vst.msk [vmem:[#allocation2 + $0x8] sm:$0xff] %vm374, %v847
        %852 = vrot.lane.b32.xlu0 %v346, 88
        %v853 = vpop.permute.xlu0 %852
        %854 = vrot.lane.b32.xlu0 %v349, 88
        %v855 = vpop.permute.xlu0 %854
        %858 = vst.msk [vmem:[#allocation2] sm:$0xff] %vm385, %v853
        %859 = vst.msk [vmem:[#allocation2 + $0x8] sm:$0xff] %vm385, %v855
        %v860 = vld [vmem:[#allocation2] sm:$0xff]
        %v861 = vld [vmem:[#allocation2 + $0x8] sm:$0xff]
        %v863 = vsel %vm285, %v827, 0
        %865 = vmatpush.msra.mxu0 0.0
        %866 = vmatpush.msra.mxu0 0.0
        %867 = vmatpush.msra.mxu0 0.0
        %868 = vmatpush.msra.mxu0 0.0
        %869 = vmatpush.msra.mxu0 0.0
        %870 = vmatpush.msra.mxu0 0.0
        %871 = vmatpush.msra.mxu0 0.0
        %872 = vmatpush.msra.mxu0 0.0
        %873 = vmatpush.msra.mxu0 0.0
        %874 = vmatpush.msra.mxu0 0.0
        %875 = vmatpush.msra.mxu0 0.0
        %876 = vmatpush.msra.mxu0 0.0
        %877 = vmatpush.msra.mxu0 0.0
        %878 = vmatpush.msra.mxu0 0.0
        %879 = vmatpush.msra.mxu0 %v861
        %880 = vmatpush.msra.mxu0 %v860
        %881 = vmatmul.f32.gmra.mxu0 %v863
        %v882 = vpop.f32.mrf.mxu0
        %v883 = vadd.f32 0.0, %v882
        %884 = vdwg.mxu0
        %s885 = scalar_lea.vmem %s258, 64 [#allocation8]
        %886 = vst.msk [vmem:[%s885] sm:$0xff] %vm413, %v883
        %s887 = scalar_lea.vmem %s220, 72 [#allocation5]
        %v888 = vld [vmem:[%s887] sm:$0xff]
        %889 = vrot.lane.b32.xlu0 %v328, 56
        %v890 = vpop.permute.xlu0 %889
        %891 = vrot.lane.b32.xlu0 %v331, 56
        %v892 = vpop.permute.xlu0 %891
        %895 = vst.msk [vmem:[#allocation2] sm:$0xff] %vm352, %v890
        %896 = vst.msk [vmem:[#allocation2 + $0x8] sm:$0xff] %vm352, %v892
        %897 = vrot.lane.b32.xlu0 %v334, 64
        %v898 = vpop.permute.xlu0 %897
        %899 = vrot.lane.b32.xlu0 %v337, 64
        %v900 = vpop.permute.xlu0 %899
        %903 = vst.msk [vmem:[#allocation2] sm:$0xff] %vm363, %v898
        %904 = vst.msk [vmem:[#allocation2 + $0x8] sm:$0xff] %vm363, %v900
        %905 = vrot.lane.b32.xlu0 %v340, 72
        %v906 = vpop.permute.xlu0 %905
        %907 = vrot.lane.b32.xlu0 %v343, 72
        %v908 = vpop.permute.xlu0 %907
        %911 = vst.msk [vmem:[#allocation2] sm:$0xff] %vm374, %v906
        %912 = vst.msk [vmem:[#allocation2 + $0x8] sm:$0xff] %vm374, %v908
        %913 = vrot.lane.b32.xlu0 %v346, 80
        %v914 = vpop.permute.xlu0 %913
        %915 = vrot.lane.b32.xlu0 %v349, 80
        %v916 = vpop.permute.xlu0 %915
        %919 = vst.msk [vmem:[#allocation2] sm:$0xff] %vm385, %v914
        %920 = vst.msk [vmem:[#allocation2 + $0x8] sm:$0xff] %vm385, %v916
        %v921 = vld [vmem:[#allocation2] sm:$0xff]
        %v922 = vld [vmem:[#allocation2 + $0x8] sm:$0xff]
        %v924 = vsel %vm285, %v888, 0
        %926 = vmatpush.msra.mxu0 0.0
        %927 = vmatpush.msra.mxu0 0.0
        %928 = vmatpush.msra.mxu0 0.0
        %929 = vmatpush.msra.mxu0 0.0
        %930 = vmatpush.msra.mxu0 0.0
        %931 = vmatpush.msra.mxu0 0.0
        %932 = vmatpush.msra.mxu0 0.0
        %933 = vmatpush.msra.mxu0 0.0
        %934 = vmatpush.msra.mxu0 0.0
        %935 = vmatpush.msra.mxu0 0.0
        %936 = vmatpush.msra.mxu0 0.0
        %937 = vmatpush.msra.mxu0 0.0
        %938 = vmatpush.msra.mxu0 0.0
        %939 = vmatpush.msra.mxu0 0.0
        %940 = vmatpush.msra.mxu0 %v922
        %941 = vmatpush.msra.mxu0 %v921
        %942 = vmatmul.f32.gmra.mxu0 %v924
        %v943 = vpop.f32.mrf.mxu0
        %v944 = vadd.f32 0.0, %v943
        %945 = vdwg.mxu0
        %s946 = scalar_lea.vmem %s258, 72 [#allocation8]
        %947 = vst.msk [vmem:[%s946] sm:$0xff] %vm413, %v944
        %s948 = scalar_lea.vmem %s220, 80 [#allocation5]
        %v949 = vld [vmem:[%s948] sm:$0xff]
        %950 = vrot.lane.b32.xlu0 %v328, 48
        %v951 = vpop.permute.xlu0 %950
        %952 = vrot.lane.b32.xlu0 %v331, 48
        %v953 = vpop.permute.xlu0 %952
        %956 = vst.msk [vmem:[#allocation2] sm:$0xff] %vm352, %v951
        %957 = vst.msk [vmem:[#allocation2 + $0x8] sm:$0xff] %vm352, %v953
        %958 = vrot.lane.b32.xlu0 %v334, 56
        %v959 = vpop.permute.xlu0 %958
        %960 = vrot.lane.b32.xlu0 %v337, 56
        %v961 = vpop.permute.xlu0 %960
        %964 = vst.msk [vmem:[#allocation2] sm:$0xff] %vm363, %v959
        %965 = vst.msk [vmem:[#allocation2 + $0x8] sm:$0xff] %vm363, %v961
        %966 = vrot.lane.b32.xlu0 %v340, 64
        %v967 = vpop.permute.xlu0 %966
        %968 = vrot.lane.b32.xlu0 %v343, 64
        %v969 = vpop.permute.xlu0 %968
        %972 = vst.msk [vmem:[#allocation2] sm:$0xff] %vm374, %v967
        %973 = vst.msk [vmem:[#allocation2 + $0x8] sm:$0xff] %vm374, %v969
        %974 = vrot.lane.b32.xlu0 %v346, 72
        %v975 = vpop.permute.xlu0 %974
        %976 = vrot.lane.b32.xlu0 %v349, 72
        %v977 = vpop.permute.xlu0 %976
        %980 = vst.msk [vmem:[#allocation2] sm:$0xff] %vm385, %v975
        %981 = vst.msk [vmem:[#allocation2 + $0x8] sm:$0xff] %vm385, %v977
        %v982 = vld [vmem:[#allocation2] sm:$0xff]
        %v983 = vld [vmem:[#allocation2 + $0x8] sm:$0xff]
        %v985 = vsel %vm285, %v949, 0
        %987 = vmatpush.msra.mxu0 0.0
        %988 = vmatpush.msra.mxu0 0.0
        %989 = vmatpush.msra.mxu0 0.0
        %990 = vmatpush.msra.mxu0 0.0
        %991 = vmatpush.msra.mxu0 0.0
        %992 = vmatpush.msra.mxu0 0.0
        %993 = vmatpush.msra.mxu0 0.0
        %994 = vmatpush.msra.mxu0 0.0
        %995 = vmatpush.msra.mxu0 0.0
        %996 = vmatpush.msra.mxu0 0.0
        %997 = vmatpush.msra.mxu0 0.0
        %998 = vmatpush.msra.mxu0 0.0
        %999 = vmatpush.msra.mxu0 0.0
        %1000 = vmatpush.msra.mxu0 0.0
        %1001 = vmatpush.msra.mxu0 %v983
        %1002 = vmatpush.msra.mxu0 %v982
        %1003 = vmatmul.f32.gmra.mxu0 %v985
        %v1004 = vpop.f32.mrf.mxu0
        %v1005 = vadd.f32 0.0, %v1004
        %1006 = vdwg.mxu0
        %s1007 = scalar_lea.vmem %s258, 80 [#allocation8]
        %1008 = vst.msk [vmem:[%s1007] sm:$0xff] %vm413, %v1005
        %s1009 = scalar_lea.vmem %s220, 88 [#allocation5]
        %v1010 = vld [vmem:[%s1009] sm:$0xff]
        %1011 = vrot.lane.b32.xlu0 %v328, 40
        %v1012 = vpop.permute.xlu0 %1011
        %1013 = vrot.lane.b32.xlu0 %v331, 40
        %v1014 = vpop.permute.xlu0 %1013
        %1017 = vst.msk [vmem:[#allocation2] sm:$0xff] %vm352, %v1012
        %1018 = vst.msk [vmem:[#allocation2 + $0x8] sm:$0xff] %vm352, %v1014
        %1019 = vrot.lane.b32.xlu0 %v334, 48
        %v1020 = vpop.permute.xlu0 %1019
        %1021 = vrot.lane.b32.xlu0 %v337, 48
        %v1022 = vpop.permute.xlu0 %1021
        %1025 = vst.msk [vmem:[#allocation2] sm:$0xff] %vm363, %v1020
        %1026 = vst.msk [vmem:[#allocation2 + $0x8] sm:$0xff] %vm363, %v1022
        %1027 = vrot.lane.b32.xlu0 %v340, 56
        %v1028 = vpop.permute.xlu0 %1027
        %1029 = vrot.lane.b32.xlu0 %v343, 56
        %v1030 = vpop.permute.xlu0 %1029
        %1033 = vst.msk [vmem:[#allocation2] sm:$0xff] %vm374, %v1028
        %1034 = vst.msk [vmem:[#allocation2 + $0x8] sm:$0xff] %vm374, %v1030
        %1035 = vrot.lane.b32.xlu0 %v346, 64
        %v1036 = vpop.permute.xlu0 %1035
        %1037 = vrot.lane.b32.xlu0 %v349, 64
        %v1038 = vpop.permute.xlu0 %1037
        %1041 = vst.msk [vmem:[#allocation2] sm:$0xff] %vm385, %v1036
        %1042 = vst.msk [vmem:[#allocation2 + $0x8] sm:$0xff] %vm385, %v1038
        %v1043 = vld [vmem:[#allocation2] sm:$0xff]
        %v1044 = vld [vmem:[#allocation2 + $0x8] sm:$0xff]
        %v1046 = vsel %vm285, %v1010, 0
        %1048 = vmatpush.msra.mxu0 0.0
        %1049 = vmatpush.msra.mxu0 0.0
        %1050 = vmatpush.msra.mxu0 0.0
        %1051 = vmatpush.msra.mxu0 0.0
        %1052 = vmatpush.msra.mxu0 0.0
        %1053 = vmatpush.msra.mxu0 0.0
        %1054 = vmatpush.msra.mxu0 0.0
        %1055 = vmatpush.msra.mxu0 0.0
        %1056 = vmatpush.msra.mxu0 0.0
        %1057 = vmatpush.msra.mxu0 0.0
        %1058 = vmatpush.msra.mxu0 0.0
        %1059 = vmatpush.msra.mxu0 0.0
        %1060 = vmatpush.msra.mxu0 0.0
        %1061 = vmatpush.msra.mxu0 0.0
        %1062 = vmatpush.msra.mxu0 %v1044
        %1063 = vmatpush.msra.mxu0 %v1043
        %1064 = vmatmul.f32.gmra.mxu0 %v1046
        %v1065 = vpop.f32.mrf.mxu0
        %v1066 = vadd.f32 0.0, %v1065
        %1067 = vdwg.mxu0
        %s1068 = scalar_lea.vmem %s258, 88 [#allocation8]
        %1069 = vst.msk [vmem:[%s1068] sm:$0xff] %vm413, %v1066
        %s1070 = scalar_lea.vmem %s220, 96 [#allocation5]
        %v1071 = vld [vmem:[%s1070] sm:$0xff]
        %1072 = vrot.lane.b32.xlu0 %v328, 32
        %v1073 = vpop.permute.xlu0 %1072
        %1074 = vrot.lane.b32.xlu0 %v331, 32
        %v1075 = vpop.permute.xlu0 %1074
        %1078 = vst.msk [vmem:[#allocation2] sm:$0xff] %vm352, %v1073
        %1079 = vst.msk [vmem:[#allocation2 + $0x8] sm:$0xff] %vm352, %v1075
        %1080 = vrot.lane.b32.xlu0 %v334, 40
        %v1081 = vpop.permute.xlu0 %1080
        %1082 = vrot.lane.b32.xlu0 %v337, 40
        %v1083 = vpop.permute.xlu0 %1082
        %1086 = vst.msk [vmem:[#allocation2] sm:$0xff] %vm363, %v1081
        %1087 = vst.msk [vmem:[#allocation2 + $0x8] sm:$0xff] %vm363, %v1083
        %1088 = vrot.lane.b32.xlu0 %v340, 48
        %v1089 = vpop.permute.xlu0 %1088
        %1090 = vrot.lane.b32.xlu0 %v343, 48
        %v1091 = vpop.permute.xlu0 %1090
        %1094 = vst.msk [vmem:[#allocation2] sm:$0xff] %vm374, %v1089
        %1095 = vst.msk [vmem:[#allocation2 + $0x8] sm:$0xff] %vm374, %v1091
        %1096 = vrot.lane.b32.xlu0 %v346, 56
        %v1097 = vpop.permute.xlu0 %1096
        %1098 = vrot.lane.b32.xlu0 %v349, 56
        %v1099 = vpop.permute.xlu0 %1098
        %1102 = vst.msk [vmem:[#allocation2] sm:$0xff] %vm385, %v1097
        %1103 = vst.msk [vmem:[#allocation2 + $0x8] sm:$0xff] %vm385, %v1099
        %v1104 = vld [vmem:[#allocation2] sm:$0xff]
        %v1105 = vld [vmem:[#allocation2 + $0x8] sm:$0xff]
        %v1107 = vsel %vm285, %v1071, 0
        %1109 = vmatpush.msra.mxu0 0.0
        %1110 = vmatpush.msra.mxu0 0.0
        %1111 = vmatpush.msra.mxu0 0.0
        %1112 = vmatpush.msra.mxu0 0.0
        %1113 = vmatpush.msra.mxu0 0.0
        %1114 = vmatpush.msra.mxu0 0.0
        %1115 = vmatpush.msra.mxu0 0.0
        %1116 = vmatpush.msra.mxu0 0.0
        %1117 = vmatpush.msra.mxu0 0.0
        %1118 = vmatpush.msra.mxu0 0.0
        %1119 = vmatpush.msra.mxu0 0.0
        %1120 = vmatpush.msra.mxu0 0.0
        %1121 = vmatpush.msra.mxu0 0.0
        %1122 = vmatpush.msra.mxu0 0.0
        %1123 = vmatpush.msra.mxu0 %v1105
        %1124 = vmatpush.msra.mxu0 %v1104
        %1125 = vmatmul.f32.gmra.mxu0 %v1107
        %v1126 = vpop.f32.mrf.mxu0
        %v1127 = vadd.f32 0.0, %v1126
        %1128 = vdwg.mxu0
        %s1129 = scalar_lea.vmem %s258, 96 [#allocation8]
        %1130 = vst.msk [vmem:[%s1129] sm:$0xff] %vm413, %v1127
        %s1131 = scalar_lea.vmem %s220, 104 [#allocation5]
        %v1132 = vld [vmem:[%s1131] sm:$0xff]
        %1133 = vrot.lane.b32.xlu0 %v328, 24
        %v1134 = vpop.permute.xlu0 %1133
        %1135 = vrot.lane.b32.xlu0 %v331, 24
        %v1136 = vpop.permute.xlu0 %1135
        %1139 = vst.msk [vmem:[#allocation2] sm:$0xff] %vm352, %v1134
        %1140 = vst.msk [vmem:[#allocation2 + $0x8] sm:$0xff] %vm352, %v1136
        %1141 = vrot.lane.b32.xlu0 %v334, 32
        %v1142 = vpop.permute.xlu0 %1141
        %1143 = vrot.lane.b32.xlu0 %v337, 32
        %v1144 = vpop.permute.xlu0 %1143
        %1147 = vst.msk [vmem:[#allocation2] sm:$0xff] %vm363, %v1142
        %1148 = vst.msk [vmem:[#allocation2 + $0x8] sm:$0xff] %vm363, %v1144
        %1149 = vrot.lane.b32.xlu0 %v340, 40
        %v1150 = vpop.permute.xlu0 %1149
        %1151 = vrot.lane.b32.xlu0 %v343, 40
        %v1152 = vpop.permute.xlu0 %1151
        %1155 = vst.msk [vmem:[#allocation2] sm:$0xff] %vm374, %v1150
        %1156 = vst.msk [vmem:[#allocation2 + $0x8] sm:$0xff] %vm374, %v1152
        %1157 = vrot.lane.b32.xlu0 %v346, 48
        %v1158 = vpop.permute.xlu0 %1157
        %1159 = vrot.lane.b32.xlu0 %v349, 48
        %v1160 = vpop.permute.xlu0 %1159
        %1163 = vst.msk [vmem:[#allocation2] sm:$0xff] %vm385, %v1158
        %1164 = vst.msk [vmem:[#allocation2 + $0x8] sm:$0xff] %vm385, %v1160
        %v1165 = vld [vmem:[#allocation2] sm:$0xff]
        %v1166 = vld [vmem:[#allocation2 + $0x8] sm:$0xff]
        %v1168 = vsel %vm285, %v1132, 0
        %1170 = vmatpush.msra.mxu0 0.0
        %1171 = vmatpush.msra.mxu0 0.0
        %1172 = vmatpush.msra.mxu0 0.0
        %1173 = vmatpush.msra.mxu0 0.0
        %1174 = vmatpush.msra.mxu0 0.0
        %1175 = vmatpush.msra.mxu0 0.0
        %1176 = vmatpush.msra.mxu0 0.0
        %1177 = vmatpush.msra.mxu0 0.0
        %1178 = vmatpush.msra.mxu0 0.0
        %1179 = vmatpush.msra.mxu0 0.0
        %1180 = vmatpush.msra.mxu0 0.0
        %1181 = vmatpush.msra.mxu0 0.0
        %1182 = vmatpush.msra.mxu0 0.0
        %1183 = vmatpush.msra.mxu0 0.0
        %1184 = vmatpush.msra.mxu0 %v1166
        %1185 = vmatpush.msra.mxu0 %v1165
        %1186 = vmatmul.f32.gmra.mxu0 %v1168
        %v1187 = vpop.f32.mrf.mxu0
        %v1188 = vadd.f32 0.0, %v1187
        %1189 = vdwg.mxu0
        %s1190 = scalar_lea.vmem %s258, 104 [#allocation8]
        %1191 = vst.msk [vmem:[%s1190] sm:$0xff] %vm413, %v1188
        %s1192 = scalar_lea.vmem %s220, 112 [#allocation5]
        %v1193 = vld [vmem:[%s1192] sm:$0xff]
        %1194 = vrot.lane.b32.xlu0 %v328, 16
        %v1195 = vpop.permute.xlu0 %1194
        %1196 = vrot.lane.b32.xlu0 %v331, 16
        %v1197 = vpop.permute.xlu0 %1196
        %1200 = vst.msk [vmem:[#allocation2] sm:$0xff] %vm352, %v1195
        %1201 = vst.msk [vmem:[#allocation2 + $0x8] sm:$0xff] %vm352, %v1197
        %1202 = vrot.lane.b32.xlu0 %v334, 24
        %v1203 = vpop.permute.xlu0 %1202
        %1204 = vrot.lane.b32.xlu0 %v337, 24
        %v1205 = vpop.permute.xlu0 %1204
        %1208 = vst.msk [vmem:[#allocation2] sm:$0xff] %vm363, %v1203
        %1209 = vst.msk [vmem:[#allocation2 + $0x8] sm:$0xff] %vm363, %v1205
        %1210 = vrot.lane.b32.xlu0 %v340, 32
        %v1211 = vpop.permute.xlu0 %1210
        %1212 = vrot.lane.b32.xlu0 %v343, 32
        %v1213 = vpop.permute.xlu0 %1212
        %1216 = vst.msk [vmem:[#allocation2] sm:$0xff] %vm374, %v1211
        %1217 = vst.msk [vmem:[#allocation2 + $0x8] sm:$0xff] %vm374, %v1213
        %1218 = vrot.lane.b32.xlu0 %v346, 40
        %v1219 = vpop.permute.xlu0 %1218
        %1220 = vrot.lane.b32.xlu0 %v349, 40
        %v1221 = vpop.permute.xlu0 %1220
        %1224 = vst.msk [vmem:[#allocation2] sm:$0xff] %vm385, %v1219
        %1225 = vst.msk [vmem:[#allocation2 + $0x8] sm:$0xff] %vm385, %v1221
        %v1226 = vld [vmem:[#allocation2] sm:$0xff]
        %v1227 = vld [vmem:[#allocation2 + $0x8] sm:$0xff]
        %v1229 = vsel %vm285, %v1193, 0
        %1231 = vmatpush.msra.mxu0 0.0
        %1232 = vmatpush.msra.mxu0 0.0
        %1233 = vmatpush.msra.mxu0 0.0
        %1234 = vmatpush.msra.mxu0 0.0
        %1235 = vmatpush.msra.mxu0 0.0
        %1236 = vmatpush.msra.mxu0 0.0
        %1237 = vmatpush.msra.mxu0 0.0
        %1238 = vmatpush.msra.mxu0 0.0
        %1239 = vmatpush.msra.mxu0 0.0
        %1240 = vmatpush.msra.mxu0 0.0
        %1241 = vmatpush.msra.mxu0 0.0
        %1242 = vmatpush.msra.mxu0 0.0
        %1243 = vmatpush.msra.mxu0 0.0
        %1244 = vmatpush.msra.mxu0 0.0
        %1245 = vmatpush.msra.mxu0 %v1227
        %1246 = vmatpush.msra.mxu0 %v1226
        %1247 = vmatmul.f32.gmra.mxu0 %v1229
        %v1248 = vpop.f32.mrf.mxu0
        %v1249 = vadd.f32 0.0, %v1248
        %1250 = vdwg.mxu0
        %s1251 = scalar_lea.vmem %s258, 112 [#allocation8]
        %1252 = vst.msk [vmem:[%s1251] sm:$0xff] %vm413, %v1249
        %s1253 = scalar_lea.vmem %s220, 120 [#allocation5]
        %v1254 = vld [vmem:[%s1253] sm:$0xff]
        %1255 = vrot.lane.b32.xlu0 %v328, 8
        %v1256 = vpop.permute.xlu0 %1255
        %1257 = vrot.lane.b32.xlu0 %v331, 8
        %v1258 = vpop.permute.xlu0 %1257
        %1261 = vst.msk [vmem:[#allocation2] sm:$0xff] %vm352, %v1256
        %1262 = vst.msk [vmem:[#allocation2 + $0x8] sm:$0xff] %vm352, %v1258
        %1263 = vrot.lane.b32.xlu0 %v334, 16
        %v1264 = vpop.permute.xlu0 %1263
        %1265 = vrot.lane.b32.xlu0 %v337, 16
        %v1266 = vpop.permute.xlu0 %1265
        %1269 = vst.msk [vmem:[#allocation2] sm:$0xff] %vm363, %v1264
        %1270 = vst.msk [vmem:[#allocation2 + $0x8] sm:$0xff] %vm363, %v1266
        %1271 = vrot.lane.b32.xlu0 %v340, 24
        %v1272 = vpop.permute.xlu0 %1271
        %1273 = vrot.lane.b32.xlu0 %v343, 24
        %v1274 = vpop.permute.xlu0 %1273
        %1277 = vst.msk [vmem:[#allocation2] sm:$0xff] %vm374, %v1272
        %1278 = vst.msk [vmem:[#allocation2 + $0x8] sm:$0xff] %vm374, %v1274
        %1279 = vrot.lane.b32.xlu0 %v346, 32
        %v1280 = vpop.permute.xlu0 %1279
        %1281 = vrot.lane.b32.xlu0 %v349, 32
        %v1282 = vpop.permute.xlu0 %1281
        %1285 = vst.msk [vmem:[#allocation2] sm:$0xff] %vm385, %v1280
        %1286 = vst.msk [vmem:[#allocation2 + $0x8] sm:$0xff] %vm385, %v1282
        %v1287 = vld [vmem:[#allocation2] sm:$0xff]
        %v1288 = vld [vmem:[#allocation2 + $0x8] sm:$0xff]
        %v1290 = vsel %vm285, %v1254, 0
        %1292 = vmatpush.msra.mxu0 0.0
        %1293 = vmatpush.msra.mxu0 0.0
        %1294 = vmatpush.msra.mxu0 0.0
        %1295 = vmatpush.msra.mxu0 0.0
        %1296 = vmatpush.msra.mxu0 0.0
        %1297 = vmatpush.msra.mxu0 0.0
        %1298 = vmatpush.msra.mxu0 0.0
        %1299 = vmatpush.msra.mxu0 0.0
        %1300 = vmatpush.msra.mxu0 0.0
        %1301 = vmatpush.msra.mxu0 0.0
        %1302 = vmatpush.msra.mxu0 0.0
        %1303 = vmatpush.msra.mxu0 0.0
        %1304 = vmatpush.msra.mxu0 0.0
        %1305 = vmatpush.msra.mxu0 0.0
        %1306 = vmatpush.msra.mxu0 %v1288
        %1307 = vmatpush.msra.mxu0 %v1287
        %1308 = vmatmul.f32.gmra.mxu0 %v1290
        %v1309 = vpop.f32.mrf.mxu0
        %v1310 = vadd.f32 0.0, %v1309
        %1311 = vdwg.mxu0
        %s1312 = scalar_lea.vmem %s258, 120 [#allocation8]
        %1313 = vst.msk [vmem:[%s1312] sm:$0xff] %vm413, %v1310
        %s1314 = sand.u32 %s133, 1
        %s1315 = scalar_lea.sflag [#allocation7], %s1314
        %s1316 = sand.u32 %s133, 1
        %s1317 = smul.addr %s1316, 128
        %s1318 = scalar_lea.vmem [#allocation8], %s1317
        // Predicated region
        $region37: #{tpu_custom_call.1} parent=31 // pred_check
          %p1319 = pneg %p143
        $region38: #{tpu_custom_call.1} parent=31 // pred_check_branch
          %1321 = sbr.rel (%p1319) target = $region40
        $region39: #{tpu_custom_call.1} parent=31 // pred_region
          %1323 = vsyncadd %s1315, 0
          %s1324 = smul.addr %s33, 16
          %s1325 = smul.addr %s34, 16
          %s1326 = sadd.s32 %s1324, %s1325
          %s1327 = smul.addr %s1326, 8
          %s1328 = scalar_lea.hbm %s4, %s1327
          %s1329 = sshll.u32 %s1318, 4
          %s1330 = int_to_ptr.vmem [resolvable:$true] %s1329
          %s1331 = sshll.u32 %s1328, 4
          %s1332 = int_to_ptr.hbm [resolvable:$true] %s1331
          %1337 = dma.vmem_to_hbm [thread:$0]  %s1330, 2048, %s1332, %s1315, 128, 128, 8
        $region40: #{tpu_custom_call.1} parent=31 // pred_fallthru
          _
      $region32: #{tpu_custom_call.1} parent=5 // pred_fallthru
        _
      %p1338 = scmp.le.s32.totalorder 2, %s24
      // Predicated region
      $region41: #{tpu_custom_call.1} parent=5 // pred_check
        %p1339 = pneg %p1338
      $region42: #{tpu_custom_call.1} parent=5 // pred_check_branch
        %1341 = sbr.rel (%p1339) target = $region44
      $region43: #{tpu_custom_call.1} parent=5 // pred_region
        %s1342 = ssub.s32 %s24, 2
        // Predicated region
        $region45: #{tpu_custom_call.1} parent=43 // pred_check
          %p1343 = pneg %p149
        $region46: #{tpu_custom_call.1} parent=43 // pred_check_branch
          %1345 = sbr.rel (%p1343) target = $region48
        $region47: #{tpu_custom_call.1} parent=43 // pred_region
          %s1346 = sand.u32 %s134, 1
          %s1347 = scalar_lea.sflag [#allocation7], %s1346
          %s1348 = sand.u32 %s134, 1
          %s1349 = smul.addr %s1348, 128
          %s1350 = scalar_lea.vmem [#allocation8], %s1349
          %1352 = dma.done %s1347, 2048
        $region48: #{tpu_custom_call.1} parent=43 // pred_fallthru
          _
      $region44: #{tpu_custom_call.1} parent=5 // pred_fallthru
        _
    $region6: #{tpu_custom_call.1} parent=1 // loop_footer
      %s28 = sadd.s32 1, %s24
    $region7: #{tpu_custom_call.1} parent=1 // loop_footer_branch
      %23 = sbr.rel target = $region3
    $region8: #{tpu_custom_call.1} parent=1 // loop_exit
      _
    %1353 = vsyncpa [#allocation6], 1
    %s1354 = scalar_lea.sflag [#allocation6], 1
    %1355 = vsyncpa %s1354, 1
    %1356 = vsyncpa [#allocation7], 1
    %s1357 = scalar_lea.sflag [#allocation7], 1
    %1358 = vsyncpa %s1357, 1

</llo_original>
